<compile_context>
chip_gen: v5e
topology: v5e:2x2
jax: 0.10.0
libtpu: 0.0.40
codegen_flags: <defaults>
</compile_context>

<pallas_src>
import functools

import jax
import jax.numpy as jnp
from jax import lax
from jax.experimental import pallas as pl
from jax.experimental.pallas import tpu as pltpu


def _choose_time_block(T, max_tt=32):
    """Largest divisor of T that is <= max_tt (time steps per grid iteration)."""
    for tt in range(min(T, max_tt), 0, -1):
        if T % tt == 0:
            return tt
    return 1


# ----------------------------------------------------------------------------
# Per-layer SkipLSTM kernel: one grid iteration == TT time steps.
# ----------------------------------------------------------------------------
def _skip_lstm_layer_kernel(
    xw_ref,      # (TT, Bp, 4*hc) pre-projected gate input (X@Wx + bias, forget bias folded)
    wh_ref,      # (hc, 4*hc)     hidden->gates weight
    wdu_ref,     # (1, hc)        delta_u linear weight
    bdu_ref,     # (1, 1)         delta_u linear bias (init = 1)
    h0_ref,      # (Bp, hc)       initial h for this layer
    c0_ref,      # (Bp, hc)       initial c for this layer
    sk0_ref,     # (Bp, 1)        initial skip mask (1.0 = skip), carried over layers
    du0_ref,     # (Bp, 1)        initial delta_u, carried over layers
    out_ref,     # (TT, Bp, hc)   hidden outputs for this time block
    skf_ref,     # (Bp, 1)        final skip mask
    duf_ref,     # (Bp, 1)        final delta_u
    h_s, c_s, u_s, du_s, sk_s,    # VMEM scratch carries across time blocks
    *, hc, tt,
):
    tb = pl.program_id(0)

    @pl.when(tb == 0)
    def _():
        h_s[...] = h0_ref[...]
        c_s[...] = c0_ref[...]
        u_s[...] = jnp.ones_like(u_s)       # u is reset to ones per layer
        du_s[...] = du0_ref[...]
        sk_s[...] = sk0_ref[...]

    wh = wh_ref[...]
    wdu = wdu_ref[...]
    bdu = bdu_ref[...]

    def step(i, carry):
        h, c, u, du_prev, skip = carry
        bin_u = jnp.round(u)                 # STE forward = round (half-to-even)

        # ---- LSTM cell: only the h @ Wh matmul remains in the recurrence ----
        gates = xw_ref[i] + jnp.dot(h, wh, preferred_element_type=jnp.float32)
        f_g = jax.nn.sigmoid(gates[:, 0 * hc:1 * hc])    # forget bias folded in
        i_g = jax.nn.sigmoid(gates[:, 1 * hc:2 * hc])
        o_g = jax.nn.sigmoid(gates[:, 2 * hc:3 * hc])
        m_g = jnp.tanh(gates[:, 3 * hc:4 * hc])
        c_cell = c * f_g + m_g * i_g
        h_cell = o_g * jnp.tanh(c_cell)

        # ---- merged skip / non-skip blend (equivalent to gather/scatter) ----
        is_skip = skip > 0.5                               # (Bp, 1)
        sel = jnp.where(is_skip, 1.0 - bin_u, bin_u)       # single blend gate
        new_h = jnp.where(is_skip, h, h_cell) * sel
        new_c = jnp.where(is_skip, c, c_cell) * sel
        # du candidate from the non-skip new c (== new_c on non-skip rows).
        du_cand = jax.nn.sigmoid(
            jnp.sum(new_c * wdu, axis=-1, keepdims=True) + bdu)
        new_du = jnp.where(is_skip, du_prev, du_cand)
        new_u = jnp.where(is_skip,
                          jnp.clip(u + du_prev, 0.0, 1.0) * (1.0 - bin_u),
                          du_cand * bin_u)

        n_skips_after = jnp.ceil(0.5 / new_u) - 1.0        # /0 -> inf -> keep skipping
        new_skip = (n_skips_after > 0.0).astype(jnp.float32)

        out_ref[i] = new_h
        return (new_h, new_c, new_u, new_du, new_skip)

    carry0 = (h_s[...], c_s[...], u_s[...], du_s[...], sk_s[...])
    h, c, u, du, skip = lax.fori_loop(0, tt, step, carry0, unroll=True)

    # Carry state to the next time block.
    h_s[...] = h
    c_s[...] = c
    u_s[...] = u
    du_s[...] = du
    sk_s[...] = skip

    # Final-state outputs only on the last block (saves 4 stores per step).
    @pl.when(tb == pl.num_programs(0) - 1)
    def _():
        skf_ref[...] = skip
        duf_ref[...] = du


def run_skip_lstm_layer(x_seq, wx, wh, b, wdu, bdu, h0, c0, skip0, du0):
    T, Bp, D = x_seq.shape
    hc = h0.shape[-1]

    # Hoist the input projection out of the recurrence: one large
    # (T*Bp, D) @ (D, 4*hc) matmul instead of T tiny MXU pushes, and fold the
    # forget-gate bias (+1.0) into the bias so it is not re-added every step.
    forget_off = jnp.concatenate(
        [jnp.full((1, hc), 1.0, jnp.float32),
         jnp.zeros((1, 3 * hc), jnp.float32)], axis=1)
    xw = jnp.einsum('tbd,dg->tbg', x_seq, wx,
                    precision=jax.lax.Precision.HIGHEST) + (b + forget_off)

    tt = _choose_time_block(T)
    kernel = functools.partial(_skip_lstm_layer_kernel, hc=hc, tt=tt)

    # TODO(synk): for v7x, add a leading "parallel" batch-block grid axis to
    # use both TensorCores, and consider bf16 weights for large hc.
    grid_spec = pltpu.PrefetchScalarGridSpec(
        num_scalar_prefetch=0,
        grid=(T // tt,),
        in_specs=[
            pl.BlockSpec((tt, Bp, 4 * hc), lambda t: (t, 0, 0)),
            pl.BlockSpec((hc, 4 * hc), lambda t: (0, 0)),
            pl.BlockSpec((1, hc), lambda t: (0, 0)),
            pl.BlockSpec((1, 1), lambda t: (0, 0)),
            pl.BlockSpec((Bp, hc), lambda t: (0, 0)),
            pl.BlockSpec((Bp, hc), lambda t: (0, 0)),
            pl.BlockSpec((Bp, 1), lambda t: (0, 0)),
            pl.BlockSpec((Bp, 1), lambda t: (0, 0)),
        ],
        out_specs=[
            pl.BlockSpec((tt, Bp, hc), lambda t: (t, 0, 0)),
            pl.BlockSpec((Bp, 1), lambda t: (0, 0)),
            pl.BlockSpec((Bp, 1), lambda t: (0, 0)),
        ],
        scratch_shapes=[
            pltpu.VMEM((Bp, hc), jnp.float32),
            pltpu.VMEM((Bp, hc), jnp.float32),
            pltpu.VMEM((Bp, 1), jnp.float32),
            pltpu.VMEM((Bp, 1), jnp.float32),
            pltpu.VMEM((Bp, 1), jnp.float32),
        ],
    )
    out_shapes = (
        jax.ShapeDtypeStruct((T, Bp, hc), jnp.float32),
        jax.ShapeDtypeStruct((Bp, 1), jnp.float32),
        jax.ShapeDtypeStruct((Bp, 1), jnp.float32),
    )
    return pl.pallas_call(
        kernel,
        out_shape=out_shapes,
        grid_spec=grid_spec,
        compiler_params=pltpu.CompilerParams(
            dimension_semantics=("arbitrary",)),   # recurrence -> sequential
    )(xw, wh, wdu, bdu, h0, c0, skip0, du0)


# ----------------------------------------------------------------------------
# Parameter init (deterministic, mirrors shapes of the torch module)
# ----------------------------------------------------------------------------
def xavier_normal(key, shape):
    fan_out, fan_in = shape          # torch nn.Linear weight is (out, in)
    std = (2.0 / (fan_in + fan_out)) ** 0.5
    return std * jax.random.normal(key, shape, jnp.float32)


def init_params(key, vocab_size, ic, hc, layer_num):
    n_keys = 2 + 2 * layer_num
    keys = jax.random.split(key, n_keys)
    k = 0
    emb = jax.random.normal(keys[k], (vocab_size + 1, ic), jnp.float32); k += 1
    emb = emb.at[vocab_size].set(0.0)   # padding_idx = -1 -> row `vocab_size`

    cells = []
    for layer in range(layer_num):
        d = ic if layer == 0 else hc
        w = xavier_normal(keys[k], (4 * hc, d + hc)); k += 1     # torch layout
        wx = jnp.transpose(w[:, :d])          # (d, 4*hc)
        wh = jnp.transpose(w[:, d:])          # (hc, 4*hc)
        b = jnp.zeros((1, 4 * hc), jnp.float32)
        wdu = xavier_normal(keys[k], (1, hc)); k += 1            # (1, hc)
        bdu = jnp.ones((1, 1), jnp.float32)   # bias filled with 1 in torch
        cells.append((wx, wh, b, wdu, bdu))

    wo = jnp.transpose(xavier_normal(keys[k], (2, hc)))          # (hc, 2)
    bo = jnp.zeros((1, 2), jnp.float32)
    return emb, cells, wo, bo


# ----------------------------------------------------------------------------
# Full SkipLSTM forward (default path: return_total_u=False, no_skip=False)
# ----------------------------------------------------------------------------
def skip_lstm_forward(tokens, emb, cells, wo, bo, hc, layer_num):
    B, T, K = tokens.shape
    x = jnp.take(emb, tokens, axis=0).sum(axis=2)        # (B, T, ic)
    # emb_dropout(0.1): eval-mode identity
    x = jnp.transpose(x, (1, 0, 2))                      # (T, B, ic) time-major

    # Pad batch to a multiple of 8 sublanes; padded rows are independent in the
    # recurrence and are sliced off before the output projection.
    Bp = max(8, ((B + 7) // 8) * 8)
    if Bp != B:
        x = jnp.pad(x, ((0, 0), (0, Bp - B), (0, 0)))

    lstm_in = x
    skip = jnp.zeros((Bp, 1), jnp.float32)
    du = jnp.zeros((Bp, 1), jnp.float32)
    h0 = jnp.zeros((Bp, hc), jnp.float32)                # learn_init=False -> zeros
    c0 = jnp.zeros((Bp, hc), jnp.float32)
    for layer in range(layer_num):
        wx, wh, b, wdu, bdu = cells[layer]
        out_seq, skip, du = run_skip_lstm_layer(
            lstm_in, wx, wh, b, wdu, bdu, h0, c0, skip, du)
        lstm_in = out_seq
    final_h = lstm_in[-1, :B]                            # (B, hc), drop padding
    # Tiny (B, hc) @ (hc, 2) projection: plain XLA (lane width 2 in Pallas
    # would be fully-masked stores; launch overhead exceeds compute).
    return jnp.dot(final_h, wo, precision=jax.lax.Precision.HIGHEST) + bo


# ----------------------------------------------------------------------------
# Pure-JAX reference (same math, no Pallas) for a correctness check
# ----------------------------------------------------------------------------
def reference_forward(tokens, emb, cells, wo, bo, hc, layer_num):
    B, T, K = tokens.shape
    x = jnp.take(emb, tokens, axis=0).sum(axis=2)
    x = jnp.transpose(x, (1, 0, 2))
    hp = jax.lax.Precision.HIGHEST

    lstm_in = x
    skip = jnp.zeros((B, 1), jnp.float32)
    du = jnp.zeros((B, 1), jnp.float32)
    for layer in range(layer_num):
        wx, wh, b, wdu, bdu = cells[layer]
        h = jnp.zeros((B, hc), jnp.float32)
        c = jnp.zeros((B, hc), jnp.float32)
        u = jnp.ones((B, 1), jnp.float32)
        outs = []
        for t in range(T):
            xt = lstm_in[t]
            bin_u = jnp.round(u)
            gates = jnp.dot(xt, wx, precision=hp) + jnp.dot(h, wh, precision=hp) + b
            f_g = jax.nn.sigmoid(gates[:, 0 * hc:1 * hc] + 1.0)
            i_g = jax.nn.sigmoid(gates[:, 1 * hc:2 * hc])
            o_g = jax.nn.sigmoid(gates[:, 2 * hc:3 * hc])
            m_g = jnp.tanh(gates[:, 3 * hc:4 * hc])
            c_cell = c * f_g + m_g * i_g
            h_cell = o_g * jnp.tanh(c_cell)
            h_n = h_cell * bin_u
            c_n = c_cell * bin_u
            du_n = jax.nn.sigmoid(
                jnp.sum(c_n * wdu, axis=-1, keepdims=True) + bdu)
            u_n = du_n * bin_u
            h_k = h * (1.0 - bin_u)
            c_k = c * (1.0 - bin_u)
            du_k = du
            u_k = jnp.clip(u + du_k, 0.0, 1.0) * (1.0 - bin_u)
            is_skip = skip > 0.5
            h = jnp.where(is_skip, h_k, h_n)
            c = jnp.where(is_skip, c_k, c_n)
            u = jnp.where(is_skip, u_k, u_n)
            du = jnp.where(is_skip, du_k, du_n)
            n_skips_after = jnp.ceil(0.5 / u) - 1.0
            skip = (n_skips_after > 0.0).astype(jnp.float32)
            outs.append(h)
        lstm_in = jnp.stack(outs, axis=0)
    return jnp.dot(lstm_in[-1], wo, precision=hp) + bo


# ----------------------------------------------------------------------------
if __name__ == "__main__":
    vocab_size = 50
    ic = 16
    hc = 32
    layer_num = 2
    B, T, K = 2, 8, 3

    key = jax.random.PRNGKey(0)
    pkey, xkey = jax.random.split(key)
    emb, cells, wo, bo = init_params(pkey, vocab_size, ic, hc, layer_num)

    tokens = jax.random.randint(xkey, (B, T, K), 0, vocab_size, dtype=jnp.int32)

    out = skip_lstm_forward(tokens, emb, cells, wo, bo, hc, layer_num)
    out = jax.block_until_ready(out)

    ref = reference_forward(tokens, emb, cells, wo, bo, hc, layer_num)
    ref = jax.block_until_ready(ref)

    assert out.shape == (B, 2), out.shape
    assert bool(jnp.all(jnp.isfinite(out)))
    assert bool(jnp.allclose(out, ref, atol=2e-3, rtol=2e-3)), (out, ref)

    print("KERNEL_OK")
</pallas_src>

<mosaic_0001>
module attributes {stable_mosaic.version = 11 : i64} {
  func.func @_skip_lstm_layer_kernel(%arg0: i32, %arg1: memref<8x8x128xf32, #tpu.memory_space<vmem>>, %arg2: memref<32x128xf32, #tpu.memory_space<vmem>>, %arg3: memref<1x32xf32, #tpu.memory_space<vmem>>, %arg4: memref<1x1xf32, #tpu.memory_space<vmem>>, %arg5: memref<8x32xf32, #tpu.memory_space<vmem>>, %arg6: memref<8x32xf32, #tpu.memory_space<vmem>>, %arg7: memref<8x1xf32, #tpu.memory_space<vmem>>, %arg8: memref<8x1xf32, #tpu.memory_space<vmem>>, %arg9: memref<8x8x32xf32, #tpu.memory_space<vmem>>, %arg10: memref<8x1xf32, #tpu.memory_space<vmem>>, %arg11: memref<8x1xf32, #tpu.memory_space<vmem>>, %arg12: memref<8x32xf32, #tpu.memory_space<vmem>>, %arg13: memref<8x32xf32, #tpu.memory_space<vmem>>, %arg14: memref<8x1xf32, #tpu.memory_space<vmem>>, %arg15: memref<8x1xf32, #tpu.memory_space<vmem>>, %arg16: memref<8x1xf32, #tpu.memory_space<vmem>>) attributes {dimension_semantics = [#tpu.dimension_semantics<arbitrary>], iteration_bounds = array<i64: 1>, scalar_prefetch = 0 : i64, scratch_operands = 5 : i64, tpu.core_type = #tpu.core_type<tc>, window_params = [{transform_indices = @transform_0, window_bounds = array<i64: 8, 8, 128>}, {pipeline_mode = #tpu.pipeline_mode<synchronous>, transform_indices = @transform_1, window_bounds = array<i64: 32, 128>}, {pipeline_mode = #tpu.pipeline_mode<synchronous>, transform_indices = @transform_2, window_bounds = array<i64: 1, 32>}, {pipeline_mode = #tpu.pipeline_mode<synchronous>, transform_indices = @transform_3, window_bounds = array<i64: 1, 1>}, {pipeline_mode = #tpu.pipeline_mode<synchronous>, transform_indices = @transform_4, window_bounds = array<i64: 8, 32>}, {pipeline_mode = #tpu.pipeline_mode<synchronous>, transform_indices = @transform_5, window_bounds = array<i64: 8, 32>}, {pipeline_mode = #tpu.pipeline_mode<synchronous>, transform_indices = @transform_6, window_bounds = array<i64: 8, 1>}, {pipeline_mode = #tpu.pipeline_mode<synchronous>, transform_indices = @transform_7, window_bounds = array<i64: 8, 1>}, {transform_indices = @transform_8, window_bounds = array<i64: 8, 8, 32>}, {pipeline_mode = #tpu.pipeline_mode<synchronous>, transform_indices = @transform_9, window_bounds = array<i64: 8, 1>}, {pipeline_mode = #tpu.pipeline_mode<synchronous>, transform_indices = @transform_10, window_bounds = array<i64: 8, 1>}]} {
    %c0_i32 = arith.constant 0 : i32
    %0 = arith.cmpi eq, %arg0, %c0_i32 : i32
    %1 = arith.extui %0 : i1 to i32
    %c0_i32_0 = arith.constant 0 : i32
    %2 = arith.cmpi ne, %1, %c0_i32_0 : i32
    scf.if %2 {
      %c0_172 = arith.constant 0 : index
      %c0_173 = arith.constant 0 : index
      %667 = vector.load %arg5[%c0_172, %c0_173] : memref<8x32xf32, #tpu.memory_space<vmem>>, vector<8x32xf32>
      %c0_174 = arith.constant 0 : index
      %c0_175 = arith.constant 0 : index
      %668 = vector.load %arg12[%c0_174, %c0_175] : memref<8x32xf32, #tpu.memory_space<vmem>>, vector<8x32xf32>
      tpu.vector_store %arg12[%c0_174, %c0_175], %667 {strides = array<i32>} : memref<8x32xf32, #tpu.memory_space<vmem>>, vector<8x32xf32>,
      %c0_176 = arith.constant 0 : index
      %c0_177 = arith.constant 0 : index
      %669 = vector.load %arg6[%c0_176, %c0_177] : memref<8x32xf32, #tpu.memory_space<vmem>>, vector<8x32xf32>
      %c0_178 = arith.constant 0 : index
      %c0_179 = arith.constant 0 : index
      %670 = vector.load %arg13[%c0_178, %c0_179] : memref<8x32xf32, #tpu.memory_space<vmem>>, vector<8x32xf32>
      tpu.vector_store %arg13[%c0_178, %c0_179], %669 {strides = array<i32>} : memref<8x32xf32, #tpu.memory_space<vmem>>, vector<8x32xf32>,
      %cst_180 = arith.constant 1.000000e+00 : f32
      %671 = vector.broadcast %cst_180 : f32 to vector<8x1xf32>
      %c0_181 = arith.constant 0 : index
      %c0_182 = arith.constant 0 : index
      %672 = vector.load %arg14[%c0_181, %c0_182] : memref<8x1xf32, #tpu.memory_space<vmem>>, vector<8x1xf32>
      tpu.vector_store %arg14[%c0_181, %c0_182], %671 {strides = array<i32>} : memref<8x1xf32, #tpu.memory_space<vmem>>, vector<8x1xf32>,
      %c0_183 = arith.constant 0 : index
      %c0_184 = arith.constant 0 : index
      %673 = vector.load %arg8[%c0_183, %c0_184] : memref<8x1xf32, #tpu.memory_space<vmem>>, vector<8x1xf32>
      %c0_185 = arith.constant 0 : index
      %c0_186 = arith.constant 0 : index
      %674 = vector.load %arg15[%c0_185, %c0_186] : memref<8x1xf32, #tpu.memory_space<vmem>>, vector<8x1xf32>
      tpu.vector_store %arg15[%c0_185, %c0_186], %673 {strides = array<i32>} : memref<8x1xf32, #tpu.memory_space<vmem>>, vector<8x1xf32>,
      %c0_187 = arith.constant 0 : index
      %c0_188 = arith.constant 0 : index
      %675 = vector.load %arg7[%c0_187, %c0_188] : memref<8x1xf32, #tpu.memory_space<vmem>>, vector<8x1xf32>
      %c0_189 = arith.constant 0 : index
      %c0_190 = arith.constant 0 : index
      %676 = vector.load %arg16[%c0_189, %c0_190] : memref<8x1xf32, #tpu.memory_space<vmem>>, vector<8x1xf32>
      tpu.vector_store %arg16[%c0_189, %c0_190], %675 {strides = array<i32>} : memref<8x1xf32, #tpu.memory_space<vmem>>, vector<8x1xf32>,
    } else {
    }
    %c0 = arith.constant 0 : index
    %c0_1 = arith.constant 0 : index
    %3 = vector.load %arg2[%c0, %c0_1] : memref<32x128xf32, #tpu.memory_space<vmem>>, vector<32x128xf32>
    %c0_2 = arith.constant 0 : index
    %c0_3 = arith.constant 0 : index
    %4 = vector.load %arg3[%c0_2, %c0_3] : memref<1x32xf32, #tpu.memory_space<vmem>>, vector<1x32xf32>
    %c0_4 = arith.constant 0 : index
    %c0_5 = arith.constant 0 : index
    %5 = vector.load %arg4[%c0_4, %c0_5] : memref<1x1xf32, #tpu.memory_space<vmem>>, vector<1x1xf32>
    %c0_6 = arith.constant 0 : index
    %c0_7 = arith.constant 0 : index
    %6 = vector.load %arg12[%c0_6, %c0_7] : memref<8x32xf32, #tpu.memory_space<vmem>>, vector<8x32xf32>
    %c0_8 = arith.constant 0 : index
    %c0_9 = arith.constant 0 : index
    %7 = vector.load %arg13[%c0_8, %c0_9] : memref<8x32xf32, #tpu.memory_space<vmem>>, vector<8x32xf32>
    %c0_10 = arith.constant 0 : index
    %c0_11 = arith.constant 0 : index
    %8 = vector.load %arg14[%c0_10, %c0_11] : memref<8x1xf32, #tpu.memory_space<vmem>>, vector<8x1xf32>
    %c0_12 = arith.constant 0 : index
    %c0_13 = arith.constant 0 : index
    %9 = vector.load %arg15[%c0_12, %c0_13] : memref<8x1xf32, #tpu.memory_space<vmem>>, vector<8x1xf32>
    %c0_14 = arith.constant 0 : index
    %c0_15 = arith.constant 0 : index
    %10 = vector.load %arg16[%c0_14, %c0_15] : memref<8x1xf32, #tpu.memory_space<vmem>>, vector<8x1xf32>
    %c0_i32_16 = arith.constant 0 : i32
    %11 = math.roundeven %8 : vector<8x1xf32>
    %12 = arith.index_cast %c0_i32_16 : i32 to index
    %c0_17 = arith.constant 0 : index
    %c0_18 = arith.constant 0 : index
    %13 = vector.load %arg1[%12, %c0_17, %c0_18] : memref<8x8x128xf32, #tpu.memory_space<vmem>>, vector<1x8x128xf32>
    %14 = vector.shape_cast %13 : vector<1x8x128xf32> to vector<8x128xf32>
    %cst = arith.constant dense<0.000000e+00> : vector<8x128xf32>
    %15 = tpu.matmul %6, %3, %cst {dimension_numbers = #tpu.dot_dimension_numbers<[1], [0], [0], [1], [0, 0, 1, 1], [], []>} : vector<8x32xf32>, vector<32x128xf32>, vector<8x128xf32> -> vector<8x128xf32>
    %16 = arith.addf %14, %15 : vector<8x128xf32>
    %17 = vector.extract_strided_slice %16 {offsets = [0, 0], sizes = [8, 32], strides = [1, 1]} : vector<8x128xf32> to vector<8x32xf32>
    %18 = arith.negf %17 : vector<8x32xf32>
    %19 = math.exp %18 : vector<8x32xf32>
    %cst_19 = arith.constant 1.000000e+00 : f32
    %20 = vector.broadcast %cst_19 : f32 to vector<8x32xf32>
    %21 = arith.addf %20, %19 : vector<8x32xf32>
    %22 = arith.divf %20, %21 : vector<8x32xf32>
    %23 = vector.extract_strided_slice %16 {offsets = [0, 32], sizes = [8, 32], strides = [1, 1]} : vector<8x128xf32> to vector<8x32xf32>
    %24 = arith.negf %23 : vector<8x32xf32>
    %25 = math.exp %24 : vector<8x32xf32>
    %cst_20 = arith.constant 1.000000e+00 : f32
    %26 = vector.broadcast %cst_20 : f32 to vector<8x32xf32>
    %27 = arith.addf %26, %25 : vector<8x32xf32>
    %28 = arith.divf %26, %27 : vector<8x32xf32>
    %29 = vector.extract_strided_slice %16 {offsets = [0, 64], sizes = [8, 32], strides = [1, 1]} : vector<8x128xf32> to vector<8x32xf32>
    %30 = arith.negf %29 : vector<8x32xf32>
    %31 = math.exp %30 : vector<8x32xf32>
    %cst_21 = arith.constant 1.000000e+00 : f32
    %32 = vector.broadcast %cst_21 : f32 to vector<8x32xf32>
    %33 = arith.addf %32, %31 : vector<8x32xf32>
    %34 = arith.divf %32, %33 : vector<8x32xf32>
    %35 = vector.extract_strided_slice %16 {offsets = [0, 96], sizes = [8, 32], strides = [1, 1]} : vector<8x128xf32> to vector<8x32xf32>
    %36 = math.tanh %35 : vector<8x32xf32>
    %37 = arith.mulf %7, %22 : vector<8x32xf32>
    %38 = arith.mulf %36, %28 : vector<8x32xf32>
    %39 = arith.addf %37, %38 : vector<8x32xf32>
    %40 = math.tanh %39 : vector<8x32xf32>
    %41 = arith.mulf %34, %40 : vector<8x32xf32>
    %cst_22 = arith.constant 5.000000e-01 : f32
    %42 = vector.broadcast %cst_22 : f32 to vector<8x1xf32>
    %43 = arith.cmpf ogt, %10, %42 : vector<8x1xf32>
    %cst_23 = arith.constant 1.000000e+00 : f32
    %44 = vector.broadcast %cst_23 : f32 to vector<8x1xf32>
    %45 = arith.subf %44, %11 : vector<8x1xf32>
    %46 = arith.select %43, %45, %11 : vector<8x1xi1>, vector<8x1xf32>
    %47 = vector.shape_cast %43 : vector<8x1xi1> to vector<8x1xi1>
    %48 = vector.broadcast %47 : vector<8x1xi1> to vector<8x32xi1>
    %49 = arith.select %48, %6, %41 : vector<8x32xi1>, vector<8x32xf32>
    %50 = vector.broadcast %46 : vector<8x1xf32> to vector<8x32xf32>
    %51 = arith.mulf %49, %50 : vector<8x32xf32>
    %52 = vector.shape_cast %43 : vector<8x1xi1> to vector<8x1xi1>
    %53 = vector.broadcast %52 : vector<8x1xi1> to vector<8x32xi1>
    %54 = arith.select %53, %7, %39 : vector<8x32xi1>, vector<8x32xf32>
    %55 = vector.broadcast %46 : vector<8x1xf32> to vector<8x32xf32>
    %56 = arith.mulf %54, %55 : vector<8x32xf32>
    %57 = vector.broadcast %4 : vector<1x32xf32> to vector<8x32xf32>
    %58 = arith.mulf %56, %57 : vector<8x32xf32>
    %cst_24 = arith.constant dense<0.000000e+00> : vector<8xf32>
    %59 = vector.multi_reduction <add>, %58, %cst_24 [1] : vector<8x32xf32> to vector<8xf32>
    %60 = vector.shape_cast %59 : vector<8xf32> to vector<8x1xf32>
    %61 = vector.broadcast %5 : vector<1x1xf32> to vector<8x1xf32>
    %62 = arith.addf %60, %61 : vector<8x1xf32>
    %63 = arith.negf %62 : vector<8x1xf32>
    %64 = math.exp %63 : vector<8x1xf32>
    %cst_25 = arith.constant 1.000000e+00 : f32
    %65 = vector.broadcast %cst_25 : f32 to vector<8x1xf32>
    %66 = arith.addf %65, %64 : vector<8x1xf32>
    %67 = arith.divf %65, %66 : vector<8x1xf32>
    %68 = arith.select %43, %9, %67 : vector<8x1xi1>, vector<8x1xf32>
    %69 = arith.addf %8, %9 : vector<8x1xf32>
    %cst_26 = arith.constant 0.000000e+00 : f32
    %cst_27 = arith.constant 1.000000e+00 : f32
    %70 = vector.broadcast %cst_26 : f32 to vector<8x1xf32>
    %71 = arith.maximumf %70, %69 : vector<8x1xf32>
    %72 = vector.broadcast %cst_27 : f32 to vector<8x1xf32>
    %73 = arith.minimumf %72, %71 : vector<8x1xf32>
    %cst_28 = arith.constant 1.000000e+00 : f32
    %74 = vector.broadcast %cst_28 : f32 to vector<8x1xf32>
    %75 = arith.subf %74, %11 : vector<8x1xf32>
    %76 = arith.mulf %73, %75 : vector<8x1xf32>
    %77 = arith.mulf %67, %11 : vector<8x1xf32>
    %78 = arith.select %43, %76, %77 : vector<8x1xi1>, vector<8x1xf32>
    %cst_29 = arith.constant 5.000000e-01 : f32
    %79 = vector.broadcast %cst_29 : f32 to vector<8x1xf32>
    %80 = arith.divf %79, %78 : vector<8x1xf32>
    %81 = math.ceil %80 : vector<8x1xf32>
    %cst_30 = arith.constant 1.000000e+00 : f32
    %82 = vector.broadcast %cst_30 : f32 to vector<8x1xf32>
    %83 = arith.subf %81, %82 : vector<8x1xf32>
    %cst_31 = arith.constant 0.000000e+00 : f32
    %84 = vector.broadcast %cst_31 : f32 to vector<8x1xf32>
    %85 = arith.cmpf ogt, %83, %84 : vector<8x1xf32>
    %86 = arith.extui %85 : vector<8x1xi1> to vector<8x1xi32>
    %87 = arith.sitofp %86 : vector<8x1xi32> to vector<8x1xf32>
    %88 = arith.index_cast %c0_i32_16 : i32 to index
    %c0_32 = arith.constant 0 : index
    %c0_33 = arith.constant 0 : index
    %89 = vector.load %arg9[%88, %c0_32, %c0_33] : memref<8x8x32xf32, #tpu.memory_space<vmem>>, vector<1x8x32xf32>
    %90 = vector.shape_cast %89 : vector<1x8x32xf32> to vector<8x32xf32>
    %91 = vector.shape_cast %51 : vector<8x32xf32> to vector<1x8x32xf32>
    tpu.vector_store %arg9[%88, %c0_32, %c0_33], %91 {strides = array<i32>} : memref<8x8x32xf32, #tpu.memory_space<vmem>>, vector<1x8x32xf32>,
    %c1_i32 = arith.constant 1 : i32
    %92 = math.roundeven %78 : vector<8x1xf32>
    %93 = arith.index_cast %c1_i32 : i32 to index
    %c0_34 = arith.constant 0 : index
    %c0_35 = arith.constant 0 : index
    %94 = vector.load %arg1[%93, %c0_34, %c0_35] : memref<8x8x128xf32, #tpu.memory_space<vmem>>, vector<1x8x128xf32>
    %95 = vector.shape_cast %94 : vector<1x8x128xf32> to vector<8x128xf32>
    %cst_36 = arith.constant dense<0.000000e+00> : vector<8x128xf32>
    %96 = tpu.matmul %51, %3, %cst_36 {dimension_numbers = #tpu.dot_dimension_numbers<[1], [0], [0], [1], [0, 0, 1, 1], [], []>} : vector<8x32xf32>, vector<32x128xf32>, vector<8x128xf32> -> vector<8x128xf32>
    %97 = arith.addf %95, %96 : vector<8x128xf32>
    %98 = vector.extract_strided_slice %97 {offsets = [0, 0], sizes = [8, 32], strides = [1, 1]} : vector<8x128xf32> to vector<8x32xf32>
    %99 = arith.negf %98 : vector<8x32xf32>
    %100 = math.exp %99 : vector<8x32xf32>
    %cst_37 = arith.constant 1.000000e+00 : f32
    %101 = vector.broadcast %cst_37 : f32 to vector<8x32xf32>
    %102 = arith.addf %101, %100 : vector<8x32xf32>
    %103 = arith.divf %101, %102 : vector<8x32xf32>
    %104 = vector.extract_strided_slice %97 {offsets = [0, 32], sizes = [8, 32], strides = [1, 1]} : vector<8x128xf32> to vector<8x32xf32>
    %105 = arith.negf %104 : vector<8x32xf32>
    %106 = math.exp %105 : vector<8x32xf32>
    %cst_38 = arith.constant 1.000000e+00 : f32
    %107 = vector.broadcast %cst_38 : f32 to vector<8x32xf32>
    %108 = arith.addf %107, %106 : vector<8x32xf32>
    %109 = arith.divf %107, %108 : vector<8x32xf32>
    %110 = vector.extract_strided_slice %97 {offsets = [0, 64], sizes = [8, 32], strides = [1, 1]} : vector<8x128xf32> to vector<8x32xf32>
    %111 = arith.negf %110 : vector<8x32xf32>
    %112 = math.exp %111 : vector<8x32xf32>
    %cst_39 = arith.constant 1.000000e+00 : f32
    %113 = vector.broadcast %cst_39 : f32 to vector<8x32xf32>
    %114 = arith.addf %113, %112 : vector<8x32xf32>
    %115 = arith.divf %113, %114 : vector<8x32xf32>
    %116 = vector.extract_strided_slice %97 {offsets = [0, 96], sizes = [8, 32], strides = [1, 1]} : vector<8x128xf32> to vector<8x32xf32>
    %117 = math.tanh %116 : vector<8x32xf32>
    %118 = arith.mulf %56, %103 : vector<8x32xf32>
    %119 = arith.mulf %117, %109 : vector<8x32xf32>
    %120 = arith.addf %118, %119 : vector<8x32xf32>
    %121 = math.tanh %120 : vector<8x32xf32>
    %122 = arith.mulf %115, %121 : vector<8x32xf32>
    %cst_40 = arith.constant 5.000000e-01 : f32
    %123 = vector.broadcast %cst_40 : f32 to vector<8x1xf32>
    %124 = arith.cmpf ogt, %87, %123 : vector<8x1xf32>
    %cst_41 = arith.constant 1.000000e+00 : f32
    %125 = vector.broadcast %cst_41 : f32 to vector<8x1xf32>
    %126 = arith.subf %125, %92 : vector<8x1xf32>
    %127 = arith.select %124, %126, %92 : vector<8x1xi1>, vector<8x1xf32>
    %128 = vector.shape_cast %124 : vector<8x1xi1> to vector<8x1xi1>
    %129 = vector.broadcast %128 : vector<8x1xi1> to vector<8x32xi1>
    %130 = arith.select %129, %51, %122 : vector<8x32xi1>, vector<8x32xf32>
    %131 = vector.broadcast %127 : vector<8x1xf32> to vector<8x32xf32>
    %132 = arith.mulf %130, %131 : vector<8x32xf32>
    %133 = vector.shape_cast %124 : vector<8x1xi1> to vector<8x1xi1>
    %134 = vector.broadcast %133 : vector<8x1xi1> to vector<8x32xi1>
    %135 = arith.select %134, %56, %120 : vector<8x32xi1>, vector<8x32xf32>
    %136 = vector.broadcast %127 : vector<8x1xf32> to vector<8x32xf32>
    %137 = arith.mulf %135, %136 : vector<8x32xf32>
    %138 = vector.broadcast %4 : vector<1x32xf32> to vector<8x32xf32>
    %139 = arith.mulf %137, %138 : vector<8x32xf32>
    %cst_42 = arith.constant dense<0.000000e+00> : vector<8xf32>
    %140 = vector.multi_reduction <add>, %139, %cst_42 [1] : vector<8x32xf32> to vector<8xf32>
    %141 = vector.shape_cast %140 : vector<8xf32> to vector<8x1xf32>
    %142 = vector.broadcast %5 : vector<1x1xf32> to vector<8x1xf32>
    %143 = arith.addf %141, %142 : vector<8x1xf32>
    %144 = arith.negf %143 : vector<8x1xf32>
    %145 = math.exp %144 : vector<8x1xf32>
    %cst_43 = arith.constant 1.000000e+00 : f32
    %146 = vector.broadcast %cst_43 : f32 to vector<8x1xf32>
    %147 = arith.addf %146, %145 : vector<8x1xf32>
    %148 = arith.divf %146, %147 : vector<8x1xf32>
    %149 = arith.select %124, %68, %148 : vector<8x1xi1>, vector<8x1xf32>
    %150 = arith.addf %78, %68 : vector<8x1xf32>
    %cst_44 = arith.constant 0.000000e+00 : f32
    %cst_45 = arith.constant 1.000000e+00 : f32
    %151 = vector.broadcast %cst_44 : f32 to vector<8x1xf32>
    %152 = arith.maximumf %151, %150 : vector<8x1xf32>
    %153 = vector.broadcast %cst_45 : f32 to vector<8x1xf32>
    %154 = arith.minimumf %153, %152 : vector<8x1xf32>
    %cst_46 = arith.constant 1.000000e+00 : f32
    %155 = vector.broadcast %cst_46 : f32 to vector<8x1xf32>
    %156 = arith.subf %155, %92 : vector<8x1xf32>
    %157 = arith.mulf %154, %156 : vector<8x1xf32>
    %158 = arith.mulf %148, %92 : vector<8x1xf32>
    %159 = arith.select %124, %157, %158 : vector<8x1xi1>, vector<8x1xf32>
    %cst_47 = arith.constant 5.000000e-01 : f32
    %160 = vector.broadcast %cst_47 : f32 to vector<8x1xf32>
    %161 = arith.divf %160, %159 : vector<8x1xf32>
    %162 = math.ceil %161 : vector<8x1xf32>
    %cst_48 = arith.constant 1.000000e+00 : f32
    %163 = vector.broadcast %cst_48 : f32 to vector<8x1xf32>
    %164 = arith.subf %162, %163 : vector<8x1xf32>
    %cst_49 = arith.constant 0.000000e+00 : f32
    %165 = vector.broadcast %cst_49 : f32 to vector<8x1xf32>
    %166 = arith.cmpf ogt, %164, %165 : vector<8x1xf32>
    %167 = arith.extui %166 : vector<8x1xi1> to vector<8x1xi32>
    %168 = arith.sitofp %167 : vector<8x1xi32> to vector<8x1xf32>
    %169 = arith.index_cast %c1_i32 : i32 to index
    %c0_50 = arith.constant 0 : index
    %c0_51 = arith.constant 0 : index
    %170 = vector.load %arg9[%169, %c0_50, %c0_51] : memref<8x8x32xf32, #tpu.memory_space<vmem>>, vector<1x8x32xf32>
    %171 = vector.shape_cast %170 : vector<1x8x32xf32> to vector<8x32xf32>
    %172 = vector.shape_cast %132 : vector<8x32xf32> to vector<1x8x32xf32>
    tpu.vector_store %arg9[%169, %c0_50, %c0_51], %172 {strides = array<i32>} : memref<8x8x32xf32, #tpu.memory_space<vmem>>, vector<1x8x32xf32>,
    %c2_i32 = arith.constant 2 : i32
    %173 = math.roundeven %159 : vector<8x1xf32>
    %174 = arith.index_cast %c2_i32 : i32 to index
    %c0_52 = arith.constant 0 : index
    %c0_53 = arith.constant 0 : index
    %175 = vector.load %arg1[%174, %c0_52, %c0_53] : memref<8x8x128xf32, #tpu.memory_space<vmem>>, vector<1x8x128xf32>
    %176 = vector.shape_cast %175 : vector<1x8x128xf32> to vector<8x128xf32>
    %cst_54 = arith.constant dense<0.000000e+00> : vector<8x128xf32>
    %177 = tpu.matmul %132, %3, %cst_54 {dimension_numbers = #tpu.dot_dimension_numbers<[1], [0], [0], [1], [0, 0, 1, 1], [], []>} : vector<8x32xf32>, vector<32x128xf32>, vector<8x128xf32> -> vector<8x128xf32>
    %178 = arith.addf %176, %177 : vector<8x128xf32>
    %179 = vector.extract_strided_slice %178 {offsets = [0, 0], sizes = [8, 32], strides = [1, 1]} : vector<8x128xf32> to vector<8x32xf32>
    %180 = arith.negf %179 : vector<8x32xf32>
    %181 = math.exp %180 : vector<8x32xf32>
    %cst_55 = arith.constant 1.000000e+00 : f32
    %182 = vector.broadcast %cst_55 : f32 to vector<8x32xf32>
    %183 = arith.addf %182, %181 : vector<8x32xf32>
    %184 = arith.divf %182, %183 : vector<8x32xf32>
    %185 = vector.extract_strided_slice %178 {offsets = [0, 32], sizes = [8, 32], strides = [1, 1]} : vector<8x128xf32> to vector<8x32xf32>
    %186 = arith.negf %185 : vector<8x32xf32>
    %187 = math.exp %186 : vector<8x32xf32>
    %cst_56 = arith.constant 1.000000e+00 : f32
    %188 = vector.broadcast %cst_56 : f32 to vector<8x32xf32>
    %189 = arith.addf %188, %187 : vector<8x32xf32>
    %190 = arith.divf %188, %189 : vector<8x32xf32>
    %191 = vector.extract_strided_slice %178 {offsets = [0, 64], sizes = [8, 32], strides = [1, 1]} : vector<8x128xf32> to vector<8x32xf32>
    %192 = arith.negf %191 : vector<8x32xf32>
    %193 = math.exp %192 : vector<8x32xf32>
    %cst_57 = arith.constant 1.000000e+00 : f32
    %194 = vector.broadcast %cst_57 : f32 to vector<8x32xf32>
    %195 = arith.addf %194, %193 : vector<8x32xf32>
    %196 = arith.divf %194, %195 : vector<8x32xf32>
    %197 = vector.extract_strided_slice %178 {offsets = [0, 96], sizes = [8, 32], strides = [1, 1]} : vector<8x128xf32> to vector<8x32xf32>
    %198 = math.tanh %197 : vector<8x32xf32>
    %199 = arith.mulf %137, %184 : vector<8x32xf32>
    %200 = arith.mulf %198, %190 : vector<8x32xf32>
    %201 = arith.addf %199, %200 : vector<8x32xf32>
    %202 = math.tanh %201 : vector<8x32xf32>
    %203 = arith.mulf %196, %202 : vector<8x32xf32>
    %cst_58 = arith.constant 5.000000e-01 : f32
    %204 = vector.broadcast %cst_58 : f32 to vector<8x1xf32>
    %205 = arith.cmpf ogt, %168, %204 : vector<8x1xf32>
    %cst_59 = arith.constant 1.000000e+00 : f32
    %206 = vector.broadcast %cst_59 : f32 to vector<8x1xf32>
    %207 = arith.subf %206, %173 : vector<8x1xf32>
    %208 = arith.select %205, %207, %173 : vector<8x1xi1>, vector<8x1xf32>
    %209 = vector.shape_cast %205 : vector<8x1xi1> to vector<8x1xi1>
    %210 = vector.broadcast %209 : vector<8x1xi1> to vector<8x32xi1>
    %211 = arith.select %210, %132, %203 : vector<8x32xi1>, vector<8x32xf32>
    %212 = vector.broadcast %208 : vector<8x1xf32> to vector<8x32xf32>
    %213 = arith.mulf %211, %212 : vector<8x32xf32>
    %214 = vector.shape_cast %205 : vector<8x1xi1> to vector<8x1xi1>
    %215 = vector.broadcast %214 : vector<8x1xi1> to vector<8x32xi1>
    %216 = arith.select %215, %137, %201 : vector<8x32xi1>, vector<8x32xf32>
    %217 = vector.broadcast %208 : vector<8x1xf32> to vector<8x32xf32>
    %218 = arith.mulf %216, %217 : vector<8x32xf32>
    %219 = vector.broadcast %4 : vector<1x32xf32> to vector<8x32xf32>
    %220 = arith.mulf %218, %219 : vector<8x32xf32>
    %cst_60 = arith.constant dense<0.000000e+00> : vector<8xf32>
    %221 = vector.multi_reduction <add>, %220, %cst_60 [1] : vector<8x32xf32> to vector<8xf32>
    %222 = vector.shape_cast %221 : vector<8xf32> to vector<8x1xf32>
    %223 = vector.broadcast %5 : vector<1x1xf32> to vector<8x1xf32>
    %224 = arith.addf %222, %223 : vector<8x1xf32>
    %225 = arith.negf %224 : vector<8x1xf32>
    %226 = math.exp %225 : vector<8x1xf32>
    %cst_61 = arith.constant 1.000000e+00 : f32
    %227 = vector.broadcast %cst_61 : f32 to vector<8x1xf32>
    %228 = arith.addf %227, %226 : vector<8x1xf32>
    %229 = arith.divf %227, %228 : vector<8x1xf32>
    %230 = arith.select %205, %149, %229 : vector<8x1xi1>, vector<8x1xf32>
    %231 = arith.addf %159, %149 : vector<8x1xf32>
    %cst_62 = arith.constant 0.000000e+00 : f32
    %cst_63 = arith.constant 1.000000e+00 : f32
    %232 = vector.broadcast %cst_62 : f32 to vector<8x1xf32>
    %233 = arith.maximumf %232, %231 : vector<8x1xf32>
    %234 = vector.broadcast %cst_63 : f32 to vector<8x1xf32>
    %235 = arith.minimumf %234, %233 : vector<8x1xf32>
    %cst_64 = arith.constant 1.000000e+00 : f32
    %236 = vector.broadcast %cst_64 : f32 to vector<8x1xf32>
    %237 = arith.subf %236, %173 : vector<8x1xf32>
    %238 = arith.mulf %235, %237 : vector<8x1xf32>
    %239 = arith.mulf %229, %173 : vector<8x1xf32>
    %240 = arith.select %205, %238, %239 : vector<8x1xi1>, vector<8x1xf32>
    %cst_65 = arith.constant 5.000000e-01 : f32
    %241 = vector.broadcast %cst_65 : f32 to vector<8x1xf32>
    %242 = arith.divf %241, %240 : vector<8x1xf32>
    %243 = math.ceil %242 : vector<8x1xf32>
    %cst_66 = arith.constant 1.000000e+00 : f32
    %244 = vector.broadcast %cst_66 : f32 to vector<8x1xf32>
    %245 = arith.subf %243, %244 : vector<8x1xf32>
    %cst_67 = arith.constant 0.000000e+00 : f32
    %246 = vector.broadcast %cst_67 : f32 to vector<8x1xf32>
    %247 = arith.cmpf ogt, %245, %246 : vector<8x1xf32>
    %248 = arith.extui %247 : vector<8x1xi1> to vector<8x1xi32>
    %249 = arith.sitofp %248 : vector<8x1xi32> to vector<8x1xf32>
    %250 = arith.index_cast %c2_i32 : i32 to index
    %c0_68 = arith.constant 0 : index
    %c0_69 = arith.constant 0 : index
    %251 = vector.load %arg9[%250, %c0_68, %c0_69] : memref<8x8x32xf32, #tpu.memory_space<vmem>>, vector<1x8x32xf32>
    %252 = vector.shape_cast %251 : vector<1x8x32xf32> to vector<8x32xf32>
    %253 = vector.shape_cast %213 : vector<8x32xf32> to vector<1x8x32xf32>
    tpu.vector_store %arg9[%250, %c0_68, %c0_69], %253 {strides = array<i32>} : memref<8x8x32xf32, #tpu.memory_space<vmem>>, vector<1x8x32xf32>,
    %c3_i32 = arith.constant 3 : i32
    %254 = math.roundeven %240 : vector<8x1xf32>
    %255 = arith.index_cast %c3_i32 : i32 to index
    %c0_70 = arith.constant 0 : index
    %c0_71 = arith.constant 0 : index
    %256 = vector.load %arg1[%255, %c0_70, %c0_71] : memref<8x8x128xf32, #tpu.memory_space<vmem>>, vector<1x8x128xf32>
    %257 = vector.shape_cast %256 : vector<1x8x128xf32> to vector<8x128xf32>
    %cst_72 = arith.constant dense<0.000000e+00> : vector<8x128xf32>
    %258 = tpu.matmul %213, %3, %cst_72 {dimension_numbers = #tpu.dot_dimension_numbers<[1], [0], [0], [1], [0, 0, 1, 1], [], []>} : vector<8x32xf32>, vector<32x128xf32>, vector<8x128xf32> -> vector<8x128xf32>
    %259 = arith.addf %257, %258 : vector<8x128xf32>
    %260 = vector.extract_strided_slice %259 {offsets = [0, 0], sizes = [8, 32], strides = [1, 1]} : vector<8x128xf32> to vector<8x32xf32>
    %261 = arith.negf %260 : vector<8x32xf32>
    %262 = math.exp %261 : vector<8x32xf32>
    %cst_73 = arith.constant 1.000000e+00 : f32
    %263 = vector.broadcast %cst_73 : f32 to vector<8x32xf32>
    %264 = arith.addf %263, %262 : vector<8x32xf32>
    %265 = arith.divf %263, %264 : vector<8x32xf32>
    %266 = vector.extract_strided_slice %259 {offsets = [0, 32], sizes = [8, 32], strides = [1, 1]} : vector<8x128xf32> to vector<8x32xf32>
    %267 = arith.negf %266 : vector<8x32xf32>
    %268 = math.exp %267 : vector<8x32xf32>
    %cst_74 = arith.constant 1.000000e+00 : f32
    %269 = vector.broadcast %cst_74 : f32 to vector<8x32xf32>
    %270 = arith.addf %269, %268 : vector<8x32xf32>
    %271 = arith.divf %269, %270 : vector<8x32xf32>
    %272 = vector.extract_strided_slice %259 {offsets = [0, 64], sizes = [8, 32], strides = [1, 1]} : vector<8x128xf32> to vector<8x32xf32>
    %273 = arith.negf %272 : vector<8x32xf32>
    %274 = math.exp %273 : vector<8x32xf32>
    %cst_75 = arith.constant 1.000000e+00 : f32
    %275 = vector.broadcast %cst_75 : f32 to vector<8x32xf32>
    %276 = arith.addf %275, %274 : vector<8x32xf32>
    %277 = arith.divf %275, %276 : vector<8x32xf32>
    %278 = vector.extract_strided_slice %259 {offsets = [0, 96], sizes = [8, 32], strides = [1, 1]} : vector<8x128xf32> to vector<8x32xf32>
    %279 = math.tanh %278 : vector<8x32xf32>
    %280 = arith.mulf %218, %265 : vector<8x32xf32>
    %281 = arith.mulf %279, %271 : vector<8x32xf32>
    %282 = arith.addf %280, %281 : vector<8x32xf32>
    %283 = math.tanh %282 : vector<8x32xf32>
    %284 = arith.mulf %277, %283 : vector<8x32xf32>
    %cst_76 = arith.constant 5.000000e-01 : f32
    %285 = vector.broadcast %cst_76 : f32 to vector<8x1xf32>
    %286 = arith.cmpf ogt, %249, %285 : vector<8x1xf32>
    %cst_77 = arith.constant 1.000000e+00 : f32
    %287 = vector.broadcast %cst_77 : f32 to vector<8x1xf32>
    %288 = arith.subf %287, %254 : vector<8x1xf32>
    %289 = arith.select %286, %288, %254 : vector<8x1xi1>, vector<8x1xf32>
    %290 = vector.shape_cast %286 : vector<8x1xi1> to vector<8x1xi1>
    %291 = vector.broadcast %290 : vector<8x1xi1> to vector<8x32xi1>
    %292 = arith.select %291, %213, %284 : vector<8x32xi1>, vector<8x32xf32>
    %293 = vector.broadcast %289 : vector<8x1xf32> to vector<8x32xf32>
    %294 = arith.mulf %292, %293 : vector<8x32xf32>
    %295 = vector.shape_cast %286 : vector<8x1xi1> to vector<8x1xi1>
    %296 = vector.broadcast %295 : vector<8x1xi1> to vector<8x32xi1>
    %297 = arith.select %296, %218, %282 : vector<8x32xi1>, vector<8x32xf32>
    %298 = vector.broadcast %289 : vector<8x1xf32> to vector<8x32xf32>
    %299 = arith.mulf %297, %298 : vector<8x32xf32>
    %300 = vector.broadcast %4 : vector<1x32xf32> to vector<8x32xf32>
    %301 = arith.mulf %299, %300 : vector<8x32xf32>
    %cst_78 = arith.constant dense<0.000000e+00> : vector<8xf32>
    %302 = vector.multi_reduction <add>, %301, %cst_78 [1] : vector<8x32xf32> to vector<8xf32>
    %303 = vector.shape_cast %302 : vector<8xf32> to vector<8x1xf32>
    %304 = vector.broadcast %5 : vector<1x1xf32> to vector<8x1xf32>
    %305 = arith.addf %303, %304 : vector<8x1xf32>
    %306 = arith.negf %305 : vector<8x1xf32>
    %307 = math.exp %306 : vector<8x1xf32>
    %cst_79 = arith.constant 1.000000e+00 : f32
    %308 = vector.broadcast %cst_79 : f32 to vector<8x1xf32>
    %309 = arith.addf %308, %307 : vector<8x1xf32>
    %310 = arith.divf %308, %309 : vector<8x1xf32>
    %311 = arith.select %286, %230, %310 : vector<8x1xi1>, vector<8x1xf32>
    %312 = arith.addf %240, %230 : vector<8x1xf32>
    %cst_80 = arith.constant 0.000000e+00 : f32
    %cst_81 = arith.constant 1.000000e+00 : f32
    %313 = vector.broadcast %cst_80 : f32 to vector<8x1xf32>
    %314 = arith.maximumf %313, %312 : vector<8x1xf32>
    %315 = vector.broadcast %cst_81 : f32 to vector<8x1xf32>
    %316 = arith.minimumf %315, %314 : vector<8x1xf32>
    %cst_82 = arith.constant 1.000000e+00 : f32
    %317 = vector.broadcast %cst_82 : f32 to vector<8x1xf32>
    %318 = arith.subf %317, %254 : vector<8x1xf32>
    %319 = arith.mulf %316, %318 : vector<8x1xf32>
    %320 = arith.mulf %310, %254 : vector<8x1xf32>
    %321 = arith.select %286, %319, %320 : vector<8x1xi1>, vector<8x1xf32>
    %cst_83 = arith.constant 5.000000e-01 : f32
    %322 = vector.broadcast %cst_83 : f32 to vector<8x1xf32>
    %323 = arith.divf %322, %321 : vector<8x1xf32>
    %324 = math.ceil %323 : vector<8x1xf32>
    %cst_84 = arith.constant 1.000000e+00 : f32
    %325 = vector.broadcast %cst_84 : f32 to vector<8x1xf32>
    %326 = arith.subf %324, %325 : vector<8x1xf32>
    %cst_85 = arith.constant 0.000000e+00 : f32
    %327 = vector.broadcast %cst_85 : f32 to vector<8x1xf32>
    %328 = arith.cmpf ogt, %326, %327 : vector<8x1xf32>
    %329 = arith.extui %328 : vector<8x1xi1> to vector<8x1xi32>
    %330 = arith.sitofp %329 : vector<8x1xi32> to vector<8x1xf32>
    %331 = arith.index_cast %c3_i32 : i32 to index
    %c0_86 = arith.constant 0 : index
    %c0_87 = arith.constant 0 : index
    %332 = vector.load %arg9[%331, %c0_86, %c0_87] : memref<8x8x32xf32, #tpu.memory_space<vmem>>, vector<1x8x32xf32>
    %333 = vector.shape_cast %332 : vector<1x8x32xf32> to vector<8x32xf32>
    %334 = vector.shape_cast %294 : vector<8x32xf32> to vector<1x8x32xf32>
    tpu.vector_store %arg9[%331, %c0_86, %c0_87], %334 {strides = array<i32>} : memref<8x8x32xf32, #tpu.memory_space<vmem>>, vector<1x8x32xf32>,
    %c4_i32 = arith.constant 4 : i32
    %335 = math.roundeven %321 : vector<8x1xf32>
    %336 = arith.index_cast %c4_i32 : i32 to index
    %c0_88 = arith.constant 0 : index
    %c0_89 = arith.constant 0 : index
    %337 = vector.load %arg1[%336, %c0_88, %c0_89] : memref<8x8x128xf32, #tpu.memory_space<vmem>>, vector<1x8x128xf32>
    %338 = vector.shape_cast %337 : vector<1x8x128xf32> to vector<8x128xf32>
    %cst_90 = arith.constant dense<0.000000e+00> : vector<8x128xf32>
    %339 = tpu.matmul %294, %3, %cst_90 {dimension_numbers = #tpu.dot_dimension_numbers<[1], [0], [0], [1], [0, 0, 1, 1], [], []>} : vector<8x32xf32>, vector<32x128xf32>, vector<8x128xf32> -> vector<8x128xf32>
    %340 = arith.addf %338, %339 : vector<8x128xf32>
    %341 = vector.extract_strided_slice %340 {offsets = [0, 0], sizes = [8, 32], strides = [1, 1]} : vector<8x128xf32> to vector<8x32xf32>
    %342 = arith.negf %341 : vector<8x32xf32>
    %343 = math.exp %342 : vector<8x32xf32>
    %cst_91 = arith.constant 1.000000e+00 : f32
    %344 = vector.broadcast %cst_91 : f32 to vector<8x32xf32>
    %345 = arith.addf %344, %343 : vector<8x32xf32>
    %346 = arith.divf %344, %345 : vector<8x32xf32>
    %347 = vector.extract_strided_slice %340 {offsets = [0, 32], sizes = [8, 32], strides = [1, 1]} : vector<8x128xf32> to vector<8x32xf32>
    %348 = arith.negf %347 : vector<8x32xf32>
    %349 = math.exp %348 : vector<8x32xf32>
    %cst_92 = arith.constant 1.000000e+00 : f32
    %350 = vector.broadcast %cst_92 : f32 to vector<8x32xf32>
    %351 = arith.addf %350, %349 : vector<8x32xf32>
    %352 = arith.divf %350, %351 : vector<8x32xf32>
    %353 = vector.extract_strided_slice %340 {offsets = [0, 64], sizes = [8, 32], strides = [1, 1]} : vector<8x128xf32> to vector<8x32xf32>
    %354 = arith.negf %353 : vector<8x32xf32>
    %355 = math.exp %354 : vector<8x32xf32>
    %cst_93 = arith.constant 1.000000e+00 : f32
    %356 = vector.broadcast %cst_93 : f32 to vector<8x32xf32>
    %357 = arith.addf %356, %355 : vector<8x32xf32>
    %358 = arith.divf %356, %357 : vector<8x32xf32>
    %359 = vector.extract_strided_slice %340 {offsets = [0, 96], sizes = [8, 32], strides = [1, 1]} : vector<8x128xf32> to vector<8x32xf32>
    %360 = math.tanh %359 : vector<8x32xf32>
    %361 = arith.mulf %299, %346 : vector<8x32xf32>
    %362 = arith.mulf %360, %352 : vector<8x32xf32>
    %363 = arith.addf %361, %362 : vector<8x32xf32>
    %364 = math.tanh %363 : vector<8x32xf32>
    %365 = arith.mulf %358, %364 : vector<8x32xf32>
    %cst_94 = arith.constant 5.000000e-01 : f32
    %366 = vector.broadcast %cst_94 : f32 to vector<8x1xf32>
    %367 = arith.cmpf ogt, %330, %366 : vector<8x1xf32>
    %cst_95 = arith.constant 1.000000e+00 : f32
    %368 = vector.broadcast %cst_95 : f32 to vector<8x1xf32>
    %369 = arith.subf %368, %335 : vector<8x1xf32>
    %370 = arith.select %367, %369, %335 : vector<8x1xi1>, vector<8x1xf32>
    %371 = vector.shape_cast %367 : vector<8x1xi1> to vector<8x1xi1>
    %372 = vector.broadcast %371 : vector<8x1xi1> to vector<8x32xi1>
    %373 = arith.select %372, %294, %365 : vector<8x32xi1>, vector<8x32xf32>
    %374 = vector.broadcast %370 : vector<8x1xf32> to vector<8x32xf32>
    %375 = arith.mulf %373, %374 : vector<8x32xf32>
    %376 = vector.shape_cast %367 : vector<8x1xi1> to vector<8x1xi1>
    %377 = vector.broadcast %376 : vector<8x1xi1> to vector<8x32xi1>
    %378 = arith.select %377, %299, %363 : vector<8x32xi1>, vector<8x32xf32>
    %379 = vector.broadcast %370 : vector<8x1xf32> to vector<8x32xf32>
    %380 = arith.mulf %378, %379 : vector<8x32xf32>
    %381 = vector.broadcast %4 : vector<1x32xf32> to vector<8x32xf32>
    %382 = arith.mulf %380, %381 : vector<8x32xf32>
    %cst_96 = arith.constant dense<0.000000e+00> : vector<8xf32>
    %383 = vector.multi_reduction <add>, %382, %cst_96 [1] : vector<8x32xf32> to vector<8xf32>
    %384 = vector.shape_cast %383 : vector<8xf32> to vector<8x1xf32>
    %385 = vector.broadcast %5 : vector<1x1xf32> to vector<8x1xf32>
    %386 = arith.addf %384, %385 : vector<8x1xf32>
    %387 = arith.negf %386 : vector<8x1xf32>
    %388 = math.exp %387 : vector<8x1xf32>
    %cst_97 = arith.constant 1.000000e+00 : f32
    %389 = vector.broadcast %cst_97 : f32 to vector<8x1xf32>
    %390 = arith.addf %389, %388 : vector<8x1xf32>
    %391 = arith.divf %389, %390 : vector<8x1xf32>
    %392 = arith.select %367, %311, %391 : vector<8x1xi1>, vector<8x1xf32>
    %393 = arith.addf %321, %311 : vector<8x1xf32>
    %cst_98 = arith.constant 0.000000e+00 : f32
    %cst_99 = arith.constant 1.000000e+00 : f32
    %394 = vector.broadcast %cst_98 : f32 to vector<8x1xf32>
    %395 = arith.maximumf %394, %393 : vector<8x1xf32>
    %396 = vector.broadcast %cst_99 : f32 to vector<8x1xf32>
    %397 = arith.minimumf %396, %395 : vector<8x1xf32>
    %cst_100 = arith.constant 1.000000e+00 : f32
    %398 = vector.broadcast %cst_100 : f32 to vector<8x1xf32>
    %399 = arith.subf %398, %335 : vector<8x1xf32>
    %400 = arith.mulf %397, %399 : vector<8x1xf32>
    %401 = arith.mulf %391, %335 : vector<8x1xf32>
    %402 = arith.select %367, %400, %401 : vector<8x1xi1>, vector<8x1xf32>
    %cst_101 = arith.constant 5.000000e-01 : f32
    %403 = vector.broadcast %cst_101 : f32 to vector<8x1xf32>
    %404 = arith.divf %403, %402 : vector<8x1xf32>
    %405 = math.ceil %404 : vector<8x1xf32>
    %cst_102 = arith.constant 1.000000e+00 : f32
    %406 = vector.broadcast %cst_102 : f32 to vector<8x1xf32>
    %407 = arith.subf %405, %406 : vector<8x1xf32>
    %cst_103 = arith.constant 0.000000e+00 : f32
    %408 = vector.broadcast %cst_103 : f32 to vector<8x1xf32>
    %409 = arith.cmpf ogt, %407, %408 : vector<8x1xf32>
    %410 = arith.extui %409 : vector<8x1xi1> to vector<8x1xi32>
    %411 = arith.sitofp %410 : vector<8x1xi32> to vector<8x1xf32>
    %412 = arith.index_cast %c4_i32 : i32 to index
    %c0_104 = arith.constant 0 : index
    %c0_105 = arith.constant 0 : index
    %413 = vector.load %arg9[%412, %c0_104, %c0_105] : memref<8x8x32xf32, #tpu.memory_space<vmem>>, vector<1x8x32xf32>
    %414 = vector.shape_cast %413 : vector<1x8x32xf32> to vector<8x32xf32>
    %415 = vector.shape_cast %375 : vector<8x32xf32> to vector<1x8x32xf32>
    tpu.vector_store %arg9[%412, %c0_104, %c0_105], %415 {strides = array<i32>} : memref<8x8x32xf32, #tpu.memory_space<vmem>>, vector<1x8x32xf32>,
    %c5_i32 = arith.constant 5 : i32
    %416 = math.roundeven %402 : vector<8x1xf32>
    %417 = arith.index_cast %c5_i32 : i32 to index
    %c0_106 = arith.constant 0 : index
    %c0_107 = arith.constant 0 : index
    %418 = vector.load %arg1[%417, %c0_106, %c0_107] : memref<8x8x128xf32, #tpu.memory_space<vmem>>, vector<1x8x128xf32>
    %419 = vector.shape_cast %418 : vector<1x8x128xf32> to vector<8x128xf32>
    %cst_108 = arith.constant dense<0.000000e+00> : vector<8x128xf32>
    %420 = tpu.matmul %375, %3, %cst_108 {dimension_numbers = #tpu.dot_dimension_numbers<[1], [0], [0], [1], [0, 0, 1, 1], [], []>} : vector<8x32xf32>, vector<32x128xf32>, vector<8x128xf32> -> vector<8x128xf32>
    %421 = arith.addf %419, %420 : vector<8x128xf32>
    %422 = vector.extract_strided_slice %421 {offsets = [0, 0], sizes = [8, 32], strides = [1, 1]} : vector<8x128xf32> to vector<8x32xf32>
    %423 = arith.negf %422 : vector<8x32xf32>
    %424 = math.exp %423 : vector<8x32xf32>
    %cst_109 = arith.constant 1.000000e+00 : f32
    %425 = vector.broadcast %cst_109 : f32 to vector<8x32xf32>
    %426 = arith.addf %425, %424 : vector<8x32xf32>
    %427 = arith.divf %425, %426 : vector<8x32xf32>
    %428 = vector.extract_strided_slice %421 {offsets = [0, 32], sizes = [8, 32], strides = [1, 1]} : vector<8x128xf32> to vector<8x32xf32>
    %429 = arith.negf %428 : vector<8x32xf32>
    %430 = math.exp %429 : vector<8x32xf32>
    %cst_110 = arith.constant 1.000000e+00 : f32
    %431 = vector.broadcast %cst_110 : f32 to vector<8x32xf32>
    %432 = arith.addf %431, %430 : vector<8x32xf32>
    %433 = arith.divf %431, %432 : vector<8x32xf32>
    %434 = vector.extract_strided_slice %421 {offsets = [0, 64], sizes = [8, 32], strides = [1, 1]} : vector<8x128xf32> to vector<8x32xf32>
    %435 = arith.negf %434 : vector<8x32xf32>
    %436 = math.exp %435 : vector<8x32xf32>
    %cst_111 = arith.constant 1.000000e+00 : f32
    %437 = vector.broadcast %cst_111 : f32 to vector<8x32xf32>
    %438 = arith.addf %437, %436 : vector<8x32xf32>
    %439 = arith.divf %437, %438 : vector<8x32xf32>
    %440 = vector.extract_strided_slice %421 {offsets = [0, 96], sizes = [8, 32], strides = [1, 1]} : vector<8x128xf32> to vector<8x32xf32>
    %441 = math.tanh %440 : vector<8x32xf32>
    %442 = arith.mulf %380, %427 : vector<8x32xf32>
    %443 = arith.mulf %441, %433 : vector<8x32xf32>
    %444 = arith.addf %442, %443 : vector<8x32xf32>
    %445 = math.tanh %444 : vector<8x32xf32>
    %446 = arith.mulf %439, %445 : vector<8x32xf32>
    %cst_112 = arith.constant 5.000000e-01 : f32
    %447 = vector.broadcast %cst_112 : f32 to vector<8x1xf32>
    %448 = arith.cmpf ogt, %411, %447 : vector<8x1xf32>
    %cst_113 = arith.constant 1.000000e+00 : f32
    %449 = vector.broadcast %cst_113 : f32 to vector<8x1xf32>
    %450 = arith.subf %449, %416 : vector<8x1xf32>
    %451 = arith.select %448, %450, %416 : vector<8x1xi1>, vector<8x1xf32>
    %452 = vector.shape_cast %448 : vector<8x1xi1> to vector<8x1xi1>
    %453 = vector.broadcast %452 : vector<8x1xi1> to vector<8x32xi1>
    %454 = arith.select %453, %375, %446 : vector<8x32xi1>, vector<8x32xf32>
    %455 = vector.broadcast %451 : vector<8x1xf32> to vector<8x32xf32>
    %456 = arith.mulf %454, %455 : vector<8x32xf32>
    %457 = vector.shape_cast %448 : vector<8x1xi1> to vector<8x1xi1>
    %458 = vector.broadcast %457 : vector<8x1xi1> to vector<8x32xi1>
    %459 = arith.select %458, %380, %444 : vector<8x32xi1>, vector<8x32xf32>
    %460 = vector.broadcast %451 : vector<8x1xf32> to vector<8x32xf32>
    %461 = arith.mulf %459, %460 : vector<8x32xf32>
    %462 = vector.broadcast %4 : vector<1x32xf32> to vector<8x32xf32>
    %463 = arith.mulf %461, %462 : vector<8x32xf32>
    %cst_114 = arith.constant dense<0.000000e+00> : vector<8xf32>
    %464 = vector.multi_reduction <add>, %463, %cst_114 [1] : vector<8x32xf32> to vector<8xf32>
    %465 = vector.shape_cast %464 : vector<8xf32> to vector<8x1xf32>
    %466 = vector.broadcast %5 : vector<1x1xf32> to vector<8x1xf32>
    %467 = arith.addf %465, %466 : vector<8x1xf32>
    %468 = arith.negf %467 : vector<8x1xf32>
    %469 = math.exp %468 : vector<8x1xf32>
    %cst_115 = arith.constant 1.000000e+00 : f32
    %470 = vector.broadcast %cst_115 : f32 to vector<8x1xf32>
    %471 = arith.addf %470, %469 : vector<8x1xf32>
    %472 = arith.divf %470, %471 : vector<8x1xf32>
    %473 = arith.select %448, %392, %472 : vector<8x1xi1>, vector<8x1xf32>
    %474 = arith.addf %402, %392 : vector<8x1xf32>
    %cst_116 = arith.constant 0.000000e+00 : f32
    %cst_117 = arith.constant 1.000000e+00 : f32
    %475 = vector.broadcast %cst_116 : f32 to vector<8x1xf32>
    %476 = arith.maximumf %475, %474 : vector<8x1xf32>
    %477 = vector.broadcast %cst_117 : f32 to vector<8x1xf32>
    %478 = arith.minimumf %477, %476 : vector<8x1xf32>
    %cst_118 = arith.constant 1.000000e+00 : f32
    %479 = vector.broadcast %cst_118 : f32 to vector<8x1xf32>
    %480 = arith.subf %479, %416 : vector<8x1xf32>
    %481 = arith.mulf %478, %480 : vector<8x1xf32>
    %482 = arith.mulf %472, %416 : vector<8x1xf32>
    %483 = arith.select %448, %481, %482 : vector<8x1xi1>, vector<8x1xf32>
    %cst_119 = arith.constant 5.000000e-01 : f32
    %484 = vector.broadcast %cst_119 : f32 to vector<8x1xf32>
    %485 = arith.divf %484, %483 : vector<8x1xf32>
    %486 = math.ceil %485 : vector<8x1xf32>
    %cst_120 = arith.constant 1.000000e+00 : f32
    %487 = vector.broadcast %cst_120 : f32 to vector<8x1xf32>
    %488 = arith.subf %486, %487 : vector<8x1xf32>
    %cst_121 = arith.constant 0.000000e+00 : f32
    %489 = vector.broadcast %cst_121 : f32 to vector<8x1xf32>
    %490 = arith.cmpf ogt, %488, %489 : vector<8x1xf32>
    %491 = arith.extui %490 : vector<8x1xi1> to vector<8x1xi32>
    %492 = arith.sitofp %491 : vector<8x1xi32> to vector<8x1xf32>
    %493 = arith.index_cast %c5_i32 : i32 to index
    %c0_122 = arith.constant 0 : index
    %c0_123 = arith.constant 0 : index
    %494 = vector.load %arg9[%493, %c0_122, %c0_123] : memref<8x8x32xf32, #tpu.memory_space<vmem>>, vector<1x8x32xf32>
    %495 = vector.shape_cast %494 : vector<1x8x32xf32> to vector<8x32xf32>
    %496 = vector.shape_cast %456 : vector<8x32xf32> to vector<1x8x32xf32>
    tpu.vector_store %arg9[%493, %c0_122, %c0_123], %496 {strides = array<i32>} : memref<8x8x32xf32, #tpu.memory_space<vmem>>, vector<1x8x32xf32>,
    %c6_i32 = arith.constant 6 : i32
    %497 = math.roundeven %483 : vector<8x1xf32>
    %498 = arith.index_cast %c6_i32 : i32 to index
    %c0_124 = arith.constant 0 : index
    %c0_125 = arith.constant 0 : index
    %499 = vector.load %arg1[%498, %c0_124, %c0_125] : memref<8x8x128xf32, #tpu.memory_space<vmem>>, vector<1x8x128xf32>
    %500 = vector.shape_cast %499 : vector<1x8x128xf32> to vector<8x128xf32>
    %cst_126 = arith.constant dense<0.000000e+00> : vector<8x128xf32>
    %501 = tpu.matmul %456, %3, %cst_126 {dimension_numbers = #tpu.dot_dimension_numbers<[1], [0], [0], [1], [0, 0, 1, 1], [], []>} : vector<8x32xf32>, vector<32x128xf32>, vector<8x128xf32> -> vector<8x128xf32>
    %502 = arith.addf %500, %501 : vector<8x128xf32>
    %503 = vector.extract_strided_slice %502 {offsets = [0, 0], sizes = [8, 32], strides = [1, 1]} : vector<8x128xf32> to vector<8x32xf32>
    %504 = arith.negf %503 : vector<8x32xf32>
    %505 = math.exp %504 : vector<8x32xf32>
    %cst_127 = arith.constant 1.000000e+00 : f32
    %506 = vector.broadcast %cst_127 : f32 to vector<8x32xf32>
    %507 = arith.addf %506, %505 : vector<8x32xf32>
    %508 = arith.divf %506, %507 : vector<8x32xf32>
    %509 = vector.extract_strided_slice %502 {offsets = [0, 32], sizes = [8, 32], strides = [1, 1]} : vector<8x128xf32> to vector<8x32xf32>
    %510 = arith.negf %509 : vector<8x32xf32>
    %511 = math.exp %510 : vector<8x32xf32>
    %cst_128 = arith.constant 1.000000e+00 : f32
    %512 = vector.broadcast %cst_128 : f32 to vector<8x32xf32>
    %513 = arith.addf %512, %511 : vector<8x32xf32>
    %514 = arith.divf %512, %513 : vector<8x32xf32>
    %515 = vector.extract_strided_slice %502 {offsets = [0, 64], sizes = [8, 32], strides = [1, 1]} : vector<8x128xf32> to vector<8x32xf32>
    %516 = arith.negf %515 : vector<8x32xf32>
    %517 = math.exp %516 : vector<8x32xf32>
    %cst_129 = arith.constant 1.000000e+00 : f32
    %518 = vector.broadcast %cst_129 : f32 to vector<8x32xf32>
    %519 = arith.addf %518, %517 : vector<8x32xf32>
    %520 = arith.divf %518, %519 : vector<8x32xf32>
    %521 = vector.extract_strided_slice %502 {offsets = [0, 96], sizes = [8, 32], strides = [1, 1]} : vector<8x128xf32> to vector<8x32xf32>
    %522 = math.tanh %521 : vector<8x32xf32>
    %523 = arith.mulf %461, %508 : vector<8x32xf32>
    %524 = arith.mulf %522, %514 : vector<8x32xf32>
    %525 = arith.addf %523, %524 : vector<8x32xf32>
    %526 = math.tanh %525 : vector<8x32xf32>
    %527 = arith.mulf %520, %526 : vector<8x32xf32>
    %cst_130 = arith.constant 5.000000e-01 : f32
    %528 = vector.broadcast %cst_130 : f32 to vector<8x1xf32>
    %529 = arith.cmpf ogt, %492, %528 : vector<8x1xf32>
    %cst_131 = arith.constant 1.000000e+00 : f32
    %530 = vector.broadcast %cst_131 : f32 to vector<8x1xf32>
    %531 = arith.subf %530, %497 : vector<8x1xf32>
    %532 = arith.select %529, %531, %497 : vector<8x1xi1>, vector<8x1xf32>
    %533 = vector.shape_cast %529 : vector<8x1xi1> to vector<8x1xi1>
    %534 = vector.broadcast %533 : vector<8x1xi1> to vector<8x32xi1>
    %535 = arith.select %534, %456, %527 : vector<8x32xi1>, vector<8x32xf32>
    %536 = vector.broadcast %532 : vector<8x1xf32> to vector<8x32xf32>
    %537 = arith.mulf %535, %536 : vector<8x32xf32>
    %538 = vector.shape_cast %529 : vector<8x1xi1> to vector<8x1xi1>
    %539 = vector.broadcast %538 : vector<8x1xi1> to vector<8x32xi1>
    %540 = arith.select %539, %461, %525 : vector<8x32xi1>, vector<8x32xf32>
    %541 = vector.broadcast %532 : vector<8x1xf32> to vector<8x32xf32>
    %542 = arith.mulf %540, %541 : vector<8x32xf32>
    %543 = vector.broadcast %4 : vector<1x32xf32> to vector<8x32xf32>
    %544 = arith.mulf %542, %543 : vector<8x32xf32>
    %cst_132 = arith.constant dense<0.000000e+00> : vector<8xf32>
    %545 = vector.multi_reduction <add>, %544, %cst_132 [1] : vector<8x32xf32> to vector<8xf32>
    %546 = vector.shape_cast %545 : vector<8xf32> to vector<8x1xf32>
    %547 = vector.broadcast %5 : vector<1x1xf32> to vector<8x1xf32>
    %548 = arith.addf %546, %547 : vector<8x1xf32>
    %549 = arith.negf %548 : vector<8x1xf32>
    %550 = math.exp %549 : vector<8x1xf32>
    %cst_133 = arith.constant 1.000000e+00 : f32
    %551 = vector.broadcast %cst_133 : f32 to vector<8x1xf32>
    %552 = arith.addf %551, %550 : vector<8x1xf32>
    %553 = arith.divf %551, %552 : vector<8x1xf32>
    %554 = arith.select %529, %473, %553 : vector<8x1xi1>, vector<8x1xf32>
    %555 = arith.addf %483, %473 : vector<8x1xf32>
    %cst_134 = arith.constant 0.000000e+00 : f32
    %cst_135 = arith.constant 1.000000e+00 : f32
    %556 = vector.broadcast %cst_134 : f32 to vector<8x1xf32>
    %557 = arith.maximumf %556, %555 : vector<8x1xf32>
    %558 = vector.broadcast %cst_135 : f32 to vector<8x1xf32>
    %559 = arith.minimumf %558, %557 : vector<8x1xf32>
    %cst_136 = arith.constant 1.000000e+00 : f32
    %560 = vector.broadcast %cst_136 : f32 to vector<8x1xf32>
    %561 = arith.subf %560, %497 : vector<8x1xf32>
    %562 = arith.mulf %559, %561 : vector<8x1xf32>
    %563 = arith.mulf %553, %497 : vector<8x1xf32>
    %564 = arith.select %529, %562, %563 : vector<8x1xi1>, vector<8x1xf32>
    %cst_137 = arith.constant 5.000000e-01 : f32
    %565 = vector.broadcast %cst_137 : f32 to vector<8x1xf32>
    %566 = arith.divf %565, %564 : vector<8x1xf32>
    %567 = math.ceil %566 : vector<8x1xf32>
    %cst_138 = arith.constant 1.000000e+00 : f32
    %568 = vector.broadcast %cst_138 : f32 to vector<8x1xf32>
    %569 = arith.subf %567, %568 : vector<8x1xf32>
    %cst_139 = arith.constant 0.000000e+00 : f32
    %570 = vector.broadcast %cst_139 : f32 to vector<8x1xf32>
    %571 = arith.cmpf ogt, %569, %570 : vector<8x1xf32>
    %572 = arith.extui %571 : vector<8x1xi1> to vector<8x1xi32>
    %573 = arith.sitofp %572 : vector<8x1xi32> to vector<8x1xf32>
    %574 = arith.index_cast %c6_i32 : i32 to index
    %c0_140 = arith.constant 0 : index
    %c0_141 = arith.constant 0 : index
    %575 = vector.load %arg9[%574, %c0_140, %c0_141] : memref<8x8x32xf32, #tpu.memory_space<vmem>>, vector<1x8x32xf32>
    %576 = vector.shape_cast %575 : vector<1x8x32xf32> to vector<8x32xf32>
    %577 = vector.shape_cast %537 : vector<8x32xf32> to vector<1x8x32xf32>
    tpu.vector_store %arg9[%574, %c0_140, %c0_141], %577 {strides = array<i32>} : memref<8x8x32xf32, #tpu.memory_space<vmem>>, vector<1x8x32xf32>,
    %c7_i32 = arith.constant 7 : i32
    %578 = math.roundeven %564 : vector<8x1xf32>
    %579 = arith.index_cast %c7_i32 : i32 to index
    %c0_142 = arith.constant 0 : index
    %c0_143 = arith.constant 0 : index
    %580 = vector.load %arg1[%579, %c0_142, %c0_143] : memref<8x8x128xf32, #tpu.memory_space<vmem>>, vector<1x8x128xf32>
    %581 = vector.shape_cast %580 : vector<1x8x128xf32> to vector<8x128xf32>
    %cst_144 = arith.constant dense<0.000000e+00> : vector<8x128xf32>
    %582 = tpu.matmul %537, %3, %cst_144 {dimension_numbers = #tpu.dot_dimension_numbers<[1], [0], [0], [1], [0, 0, 1, 1], [], []>} : vector<8x32xf32>, vector<32x128xf32>, vector<8x128xf32> -> vector<8x128xf32>
    %583 = arith.addf %581, %582 : vector<8x128xf32>
    %584 = vector.extract_strided_slice %583 {offsets = [0, 0], sizes = [8, 32], strides = [1, 1]} : vector<8x128xf32> to vector<8x32xf32>
    %585 = arith.negf %584 : vector<8x32xf32>
    %586 = math.exp %585 : vector<8x32xf32>
    %cst_145 = arith.constant 1.000000e+00 : f32
    %587 = vector.broadcast %cst_145 : f32 to vector<8x32xf32>
    %588 = arith.addf %587, %586 : vector<8x32xf32>
    %589 = arith.divf %587, %588 : vector<8x32xf32>
    %590 = vector.extract_strided_slice %583 {offsets = [0, 32], sizes = [8, 32], strides = [1, 1]} : vector<8x128xf32> to vector<8x32xf32>
    %591 = arith.negf %590 : vector<8x32xf32>
    %592 = math.exp %591 : vector<8x32xf32>
    %cst_146 = arith.constant 1.000000e+00 : f32
    %593 = vector.broadcast %cst_146 : f32 to vector<8x32xf32>
    %594 = arith.addf %593, %592 : vector<8x32xf32>
    %595 = arith.divf %593, %594 : vector<8x32xf32>
    %596 = vector.extract_strided_slice %583 {offsets = [0, 64], sizes = [8, 32], strides = [1, 1]} : vector<8x128xf32> to vector<8x32xf32>
    %597 = arith.negf %596 : vector<8x32xf32>
    %598 = math.exp %597 : vector<8x32xf32>
    %cst_147 = arith.constant 1.000000e+00 : f32
    %599 = vector.broadcast %cst_147 : f32 to vector<8x32xf32>
    %600 = arith.addf %599, %598 : vector<8x32xf32>
    %601 = arith.divf %599, %600 : vector<8x32xf32>
    %602 = vector.extract_strided_slice %583 {offsets = [0, 96], sizes = [8, 32], strides = [1, 1]} : vector<8x128xf32> to vector<8x32xf32>
    %603 = math.tanh %602 : vector<8x32xf32>
    %604 = arith.mulf %542, %589 : vector<8x32xf32>
    %605 = arith.mulf %603, %595 : vector<8x32xf32>
    %606 = arith.addf %604, %605 : vector<8x32xf32>
    %607 = math.tanh %606 : vector<8x32xf32>
    %608 = arith.mulf %601, %607 : vector<8x32xf32>
    %cst_148 = arith.constant 5.000000e-01 : f32
    %609 = vector.broadcast %cst_148 : f32 to vector<8x1xf32>
    %610 = arith.cmpf ogt, %573, %609 : vector<8x1xf32>
    %cst_149 = arith.constant 1.000000e+00 : f32
    %611 = vector.broadcast %cst_149 : f32 to vector<8x1xf32>
    %612 = arith.subf %611, %578 : vector<8x1xf32>
    %613 = arith.select %610, %612, %578 : vector<8x1xi1>, vector<8x1xf32>
    %614 = vector.shape_cast %610 : vector<8x1xi1> to vector<8x1xi1>
    %615 = vector.broadcast %614 : vector<8x1xi1> to vector<8x32xi1>
    %616 = arith.select %615, %537, %608 : vector<8x32xi1>, vector<8x32xf32>
    %617 = vector.broadcast %613 : vector<8x1xf32> to vector<8x32xf32>
    %618 = arith.mulf %616, %617 : vector<8x32xf32>
    %619 = vector.shape_cast %610 : vector<8x1xi1> to vector<8x1xi1>
    %620 = vector.broadcast %619 : vector<8x1xi1> to vector<8x32xi1>
    %621 = arith.select %620, %542, %606 : vector<8x32xi1>, vector<8x32xf32>
    %622 = vector.broadcast %613 : vector<8x1xf32> to vector<8x32xf32>
    %623 = arith.mulf %621, %622 : vector<8x32xf32>
    %624 = vector.broadcast %4 : vector<1x32xf32> to vector<8x32xf32>
    %625 = arith.mulf %623, %624 : vector<8x32xf32>
    %cst_150 = arith.constant dense<0.000000e+00> : vector<8xf32>
    %626 = vector.multi_reduction <add>, %625, %cst_150 [1] : vector<8x32xf32> to vector<8xf32>
    %627 = vector.shape_cast %626 : vector<8xf32> to vector<8x1xf32>
    %628 = vector.broadcast %5 : vector<1x1xf32> to vector<8x1xf32>
    %629 = arith.addf %627, %628 : vector<8x1xf32>
    %630 = arith.negf %629 : vector<8x1xf32>
    %631 = math.exp %630 : vector<8x1xf32>
    %cst_151 = arith.constant 1.000000e+00 : f32
    %632 = vector.broadcast %cst_151 : f32 to vector<8x1xf32>
    %633 = arith.addf %632, %631 : vector<8x1xf32>
    %634 = arith.divf %632, %633 : vector<8x1xf32>
    %635 = arith.select %610, %554, %634 : vector<8x1xi1>, vector<8x1xf32>
    %636 = arith.addf %564, %554 : vector<8x1xf32>
    %cst_152 = arith.constant 0.000000e+00 : f32
    %cst_153 = arith.constant 1.000000e+00 : f32
    %637 = vector.broadcast %cst_152 : f32 to vector<8x1xf32>
    %638 = arith.maximumf %637, %636 : vector<8x1xf32>
    %639 = vector.broadcast %cst_153 : f32 to vector<8x1xf32>
    %640 = arith.minimumf %639, %638 : vector<8x1xf32>
    %cst_154 = arith.constant 1.000000e+00 : f32
    %641 = vector.broadcast %cst_154 : f32 to vector<8x1xf32>
    %642 = arith.subf %641, %578 : vector<8x1xf32>
    %643 = arith.mulf %640, %642 : vector<8x1xf32>
    %644 = arith.mulf %634, %578 : vector<8x1xf32>
    %645 = arith.select %610, %643, %644 : vector<8x1xi1>, vector<8x1xf32>
    %cst_155 = arith.constant 5.000000e-01 : f32
    %646 = vector.broadcast %cst_155 : f32 to vector<8x1xf32>
    %647 = arith.divf %646, %645 : vector<8x1xf32>
    %648 = math.ceil %647 : vector<8x1xf32>
    %cst_156 = arith.constant 1.000000e+00 : f32
    %649 = vector.broadcast %cst_156 : f32 to vector<8x1xf32>
    %650 = arith.subf %648, %649 : vector<8x1xf32>
    %cst_157 = arith.constant 0.000000e+00 : f32
    %651 = vector.broadcast %cst_157 : f32 to vector<8x1xf32>
    %652 = arith.cmpf ogt, %650, %651 : vector<8x1xf32>
    %653 = arith.extui %652 : vector<8x1xi1> to vector<8x1xi32>
    %654 = arith.sitofp %653 : vector<8x1xi32> to vector<8x1xf32>
    %655 = arith.index_cast %c7_i32 : i32 to index
    %c0_158 = arith.constant 0 : index
    %c0_159 = arith.constant 0 : index
    %656 = vector.load %arg9[%655, %c0_158, %c0_159] : memref<8x8x32xf32, #tpu.memory_space<vmem>>, vector<1x8x32xf32>
    %657 = vector.shape_cast %656 : vector<1x8x32xf32> to vector<8x32xf32>
    %658 = vector.shape_cast %618 : vector<8x32xf32> to vector<1x8x32xf32>
    tpu.vector_store %arg9[%655, %c0_158, %c0_159], %658 {strides = array<i32>} : memref<8x8x32xf32, #tpu.memory_space<vmem>>, vector<1x8x32xf32>,
    %c8_i32 = arith.constant 8 : i32
    %c0_160 = arith.constant 0 : index
    %c0_161 = arith.constant 0 : index
    %659 = vector.load %arg12[%c0_160, %c0_161] : memref<8x32xf32, #tpu.memory_space<vmem>>, vector<8x32xf32>
    tpu.vector_store %arg12[%c0_160, %c0_161], %618 {strides = array<i32>} : memref<8x32xf32, #tpu.memory_space<vmem>>, vector<8x32xf32>,
    %c0_162 = arith.constant 0 : index
    %c0_163 = arith.constant 0 : index
    %660 = vector.load %arg13[%c0_162, %c0_163] : memref<8x32xf32, #tpu.memory_space<vmem>>, vector<8x32xf32>
    tpu.vector_store %arg13[%c0_162, %c0_163], %623 {strides = array<i32>} : memref<8x32xf32, #tpu.memory_space<vmem>>, vector<8x32xf32>,
    %c0_164 = arith.constant 0 : index
    %c0_165 = arith.constant 0 : index
    %661 = vector.load %arg14[%c0_164, %c0_165] : memref<8x1xf32, #tpu.memory_space<vmem>>, vector<8x1xf32>
    tpu.vector_store %arg14[%c0_164, %c0_165], %645 {strides = array<i32>} : memref<8x1xf32, #tpu.memory_space<vmem>>, vector<8x1xf32>,
    %c0_166 = arith.constant 0 : index
    %c0_167 = arith.constant 0 : index
    %662 = vector.load %arg15[%c0_166, %c0_167] : memref<8x1xf32, #tpu.memory_space<vmem>>, vector<8x1xf32>
    tpu.vector_store %arg15[%c0_166, %c0_167], %635 {strides = array<i32>} : memref<8x1xf32, #tpu.memory_space<vmem>>, vector<8x1xf32>,
    %c0_168 = arith.constant 0 : index
    %c0_169 = arith.constant 0 : index
    %663 = vector.load %arg16[%c0_168, %c0_169] : memref<8x1xf32, #tpu.memory_space<vmem>>, vector<8x1xf32>
    tpu.vector_store %arg16[%c0_168, %c0_169], %654 {strides = array<i32>} : memref<8x1xf32, #tpu.memory_space<vmem>>, vector<8x1xf32>,
    %c0_i32_170 = arith.constant 0 : i32
    %664 = arith.cmpi eq, %arg0, %c0_i32_170 : i32
    %665 = arith.extui %664 : i1 to i32
    %c0_i32_171 = arith.constant 0 : i32
    %666 = arith.cmpi ne, %665, %c0_i32_171 : i32
    scf.if %666 {
      %c0_172 = arith.constant 0 : index
      %c0_173 = arith.constant 0 : index
      %667 = vector.load %arg10[%c0_172, %c0_173] : memref<8x1xf32, #tpu.memory_space<vmem>>, vector<8x1xf32>
      tpu.vector_store %arg10[%c0_172, %c0_173], %654 {strides = array<i32>} : memref<8x1xf32, #tpu.memory_space<vmem>>, vector<8x1xf32>,
      %c0_174 = arith.constant 0 : index
      %c0_175 = arith.constant 0 : index
      %668 = vector.load %arg11[%c0_174, %c0_175] : memref<8x1xf32, #tpu.memory_space<vmem>>, vector<8x1xf32>
      tpu.vector_store %arg11[%c0_174, %c0_175], %635 {strides = array<i32>} : memref<8x1xf32, #tpu.memory_space<vmem>>, vector<8x1xf32>,
    } else {
    }
    return
  }
  func.func @transform_0(%arg0: i32) -> (i32, i32, i32) {
    %c0_i32 = arith.constant 0 : i32
    %c0_i32_0 = arith.constant 0 : i32
    %c0_i32_1 = arith.constant 0 : i32
    return %arg0, %c0_i32, %c0_i32_0 : i32, i32, i32
  }
  func.func @transform_1(%arg0: i32) -> (i32, i32) {
    %c0_i32 = arith.constant 0 : i32
    %c0_i32_0 = arith.constant 0 : i32
    %c0_i32_1 = arith.constant 0 : i32
    return %c0_i32, %c0_i32_0 : i32, i32
  }
  func.func @transform_2(%arg0: i32) -> (i32, i32) {
    %c0_i32 = arith.constant 0 : i32
    %c0_i32_0 = arith.constant 0 : i32
    %c0_i32_1 = arith.constant 0 : i32
    return %c0_i32, %c0_i32_0 : i32, i32
  }
  func.func @transform_3(%arg0: i32) -> (i32, i32) {
    %c0_i32 = arith.constant 0 : i32
    %c0_i32_0 = arith.constant 0 : i32
    %c0_i32_1 = arith.constant 0 : i32
    return %c0_i32, %c0_i32_0 : i32, i32
  }
  func.func @transform_4(%arg0: i32) -> (i32, i32) {
    %c0_i32 = arith.constant 0 : i32
    %c0_i32_0 = arith.constant 0 : i32
    %c0_i32_1 = arith.constant 0 : i32
    return %c0_i32, %c0_i32_0 : i32, i32
  }
  func.func @transform_5(%arg0: i32) -> (i32, i32) {
    %c0_i32 = arith.constant 0 : i32
    %c0_i32_0 = arith.constant 0 : i32
    %c0_i32_1 = arith.constant 0 : i32
    return %c0_i32, %c0_i32_0 : i32, i32
  }
  func.func @transform_6(%arg0: i32) -> (i32, i32) {
    %c0_i32 = arith.constant 0 : i32
    %c0_i32_0 = arith.constant 0 : i32
    %c0_i32_1 = arith.constant 0 : i32
    return %c0_i32, %c0_i32_0 : i32, i32
  }
  func.func @transform_7(%arg0: i32) -> (i32, i32) {
    %c0_i32 = arith.constant 0 : i32
    %c0_i32_0 = arith.constant 0 : i32
    %c0_i32_1 = arith.constant 0 : i32
    return %c0_i32, %c0_i32_0 : i32, i32
  }
  func.func @transform_8(%arg0: i32) -> (i32, i32, i32) {
    %c0_i32 = arith.constant 0 : i32
    %c0_i32_0 = arith.constant 0 : i32
    %c0_i32_1 = arith.constant 0 : i32
    return %arg0, %c0_i32, %c0_i32_0 : i32, i32, i32
  }
  func.func @transform_9(%arg0: i32) -> (i32, i32) {
    %c0_i32 = arith.constant 0 : i32
    %c0_i32_0 = arith.constant 0 : i32
    %c0_i32_1 = arith.constant 0 : i32
    return %c0_i32, %c0_i32_0 : i32, i32
  }
  func.func @transform_10(%arg0: i32) -> (i32, i32) {
    %c0_i32 = arith.constant 0 : i32
    %c0_i32_0 = arith.constant 0 : i32
    %c0_i32_1 = arith.constant 0 : i32
    return %c0_i32, %c0_i32_0 : i32, i32
  }
}

</mosaic_0001>

<llo_original>
// kernel: tpu_custom_call.1
$region0: #{tpu_custom_call.1}
  #allocation0 [shape = 'u32[]', space=smem, size = 0x4, offset = 0x4, fixed_abs, tag = 'smem constant byte address 0x4 - core index']
  #allocation1 [shape = 'u32[72,128]{1,0:T(1,128)}', space=vmem, size = 0x9000, scoped, tag = 'internal scratch']
  #allocation2 [shape = 'f32[8,32]{1,0:T(8,128)}', space=vmem, size = 0x1000, scoped, tag = 'scratch operand']
  #allocation3 [shape = 'f32[8,32]{1,0:T(8,128)}', space=vmem, size = 0x1000, scoped, tag = 'scratch operand']
  #allocation4 [shape = 'f32[8,1]{1,0:T(8,128)}', space=vmem, size = 0x1000, scoped, tag = 'scratch operand']
  #allocation5 [shape = 'f32[8,1]{1,0:T(8,128)}', space=vmem, size = 0x1000, scoped, tag = 'scratch operand']
  #allocation6 [shape = 'f32[8,1]{1,0:T(8,128)}', space=vmem, size = 0x1000, scoped, tag = 'scratch operand']
  #allocation7 [shape = 'f32[1,1]{1,0:T(1,128)S(1)}', space=vmem, size = 0x200, scoped, tag = 'scoped memory for tpu_custom_call.1']
  %s0 = inlined_call_operand.hbm [shape: f32[8,8,128], index: 0, kind: input, shape index: {}]
  %s1 = inlined_call_operand.hbm [shape: f32[32,128], index: 1, kind: input, shape index: {}]
  %s2 = inlined_call_operand.vmem [shape: f32[1,32], index: 2, kind: input, shape index: {}]
  %s3 = inlined_call_operand.<no memory space> [shape: f32[1,1], index: 3, kind: input, shape index: {}]
  %s4 = inlined_call_operand.vmem [shape: f32[8,32], index: 4, kind: input, shape index: {}]
  %s5 = inlined_call_operand.vmem [shape: f32[8,32], index: 5, kind: input, shape index: {}]
  %s6 = inlined_call_operand.vmem [shape: f32[8,1], index: 6, kind: input, shape index: {}]
  %s7 = inlined_call_operand.vmem [shape: f32[8,1], index: 7, kind: input, shape index: {}]
  %s8 = inlined_call_operand.hbm [shape: f32[8,8,32], index: 8, kind: output, shape index: {0}]
  %s9 = inlined_call_operand.vmem [shape: f32[8,1], index: 9, kind: output, shape index: {1}]
  %s10 = inlined_call_operand.vmem [shape: f32[8,1], index: 10, kind: output, shape index: {2}]
  %11 = xla_tuple %s8, %s9, %s10
  %s12 = sld [smem:[#allocation0]]
  $region74: #{tpu_custom_call.1} parent=0
    _
  %s14 = ssub.s32 1, %s12
  %s15 = scalar_select 0, %s14, %s12
  %v16 = vstv %s3
  %17 = vst [vmem:[#allocation7] sm:$0x1] %v16
  $region1: #{tpu_custom_call.1} parent=0
    #allocation8 [shape = 'u8[32768]{0}', space=vmem, size = 0x8000, scoped, tag = 'input window, operand 0, single buffered']
    #allocation9 [shape = 's32[1]{0}', space=sflag, size = 0x4, scoped, tag = 'scoped memory for tpu_custom_call.1']
    #allocation10 [shape = 's32[1]{0}', space=sflag, size = 0x4, scoped, tag = 'scoped memory for tpu_custom_call.1']
    #allocation11 [shape = 'u8[16384]{0}', space=vmem, size = 0x4000, scoped, tag = 'input window, operand 1, single buffered']
    #allocation12 [shape = 's32[1]{0}', space=sflag, size = 0x4, scoped, tag = 'scoped memory for tpu_custom_call.1']
    #allocation13 [shape = 'u8[32768]{0}', space=vmem, size = 0x8000, scoped, tag = 'output window, operand 0, single buffered']
    %18 = vsyncpa [#allocation9], 0
    %19 = vsyncpa [#allocation12], 0
    %20 = vsyncpa [#allocation10], 0
    // Predicated region
    $region2: #{tpu_custom_call.1} parent=1 // pred_check
      _
    $region3: #{tpu_custom_call.1} parent=1 // pred_check_branch
      %22 = sbr.rel (0) target = $region5
    $region4: #{tpu_custom_call.1} parent=1 // pred_region
      %24 = vsyncadd [#allocation9], 0
      %s25 = sshll.u32 %s0, 4
      %s26 = int_to_ptr.hbm [resolvable:$true] %s25
      %s27 = sshll.u32 [#allocation8], 4
      %s28 = int_to_ptr.vmem [resolvable:$true] %s27
      %33 = dma.hbm_to_vmem [thread:$0]  %s26, 1024, %s28, [#allocation9], 128, 128, 8
    $region5: #{tpu_custom_call.1} parent=1 // pred_fallthru
      _
    // Predicated region
    $region6: #{tpu_custom_call.1} parent=1 // pred_check
      _
    $region7: #{tpu_custom_call.1} parent=1 // pred_check_branch
      %35 = sbr.rel (0) target = $region9
    $region8: #{tpu_custom_call.1} parent=1 // pred_region
      %37 = vsyncadd [#allocation12], 0
      %s38 = sshll.u32 %s1, 4
      %s39 = int_to_ptr.hbm [resolvable:$true] %s38
      %s40 = sshll.u32 [#allocation11], 4
      %s41 = int_to_ptr.vmem [resolvable:$true] %s40
      %46 = dma.hbm_to_vmem [thread:$0]  %s39, 512, %s41, [#allocation12], 128, 128, 8
    $region9: #{tpu_custom_call.1} parent=1 // pred_fallthru
      _
    // Predicated region
    $region10: #{tpu_custom_call.1} parent=1 // pred_check
      _
    $region11: #{tpu_custom_call.1} parent=1 // pred_check_branch
      %48 = sbr.rel (0) target = $region13
    $region12: #{tpu_custom_call.1} parent=1 // pred_region
      _
    $region13: #{tpu_custom_call.1} parent=1 // pred_fallthru
      _
    // Predicated region
    $region14: #{tpu_custom_call.1} parent=1 // pred_check
      _
    $region15: #{tpu_custom_call.1} parent=1 // pred_check_branch
      %50 = sbr.rel (0) target = $region17
    $region16: #{tpu_custom_call.1} parent=1 // pred_region
      _
    $region17: #{tpu_custom_call.1} parent=1 // pred_fallthru
      _
    // Predicated region
    $region18: #{tpu_custom_call.1} parent=1 // pred_check
      _
    $region19: #{tpu_custom_call.1} parent=1 // pred_check_branch
      %52 = sbr.rel (0) target = $region21
    $region20: #{tpu_custom_call.1} parent=1 // pred_region
      _
    $region21: #{tpu_custom_call.1} parent=1 // pred_fallthru
      _
    // Predicated region
    $region22: #{tpu_custom_call.1} parent=1 // pred_check
      _
    $region23: #{tpu_custom_call.1} parent=1 // pred_check_branch
      %54 = sbr.rel (0) target = $region25
    $region24: #{tpu_custom_call.1} parent=1 // pred_region
      _
    $region25: #{tpu_custom_call.1} parent=1 // pred_fallthru
      _
    // Predicated region
    $region26: #{tpu_custom_call.1} parent=1 // pred_check
      _
    $region27: #{tpu_custom_call.1} parent=1 // pred_check_branch
      %56 = sbr.rel (0) target = $region29
    $region28: #{tpu_custom_call.1} parent=1 // pred_region
      _
    $region29: #{tpu_custom_call.1} parent=1 // pred_fallthru
      _
    // Predicated region
    $region30: #{tpu_custom_call.1} parent=1 // pred_check
      _
    $region31: #{tpu_custom_call.1} parent=1 // pred_check_branch
      %58 = sbr.rel (0) target = $region33
    $region32: #{tpu_custom_call.1} parent=1 // pred_region
      _
    $region33: #{tpu_custom_call.1} parent=1 // pred_fallthru
      _
    // Predicated region
    $region34: #{tpu_custom_call.1} parent=1 // pred_check
      _
    $region35: #{tpu_custom_call.1} parent=1 // pred_check_branch
      %60 = sbr.rel (0) target = $region37
    $region36: #{tpu_custom_call.1} parent=1 // pred_region
      %62 = dma.done [#allocation9], 1024
    $region37: #{tpu_custom_call.1} parent=1 // pred_fallthru
      _
    // Predicated region
    $region38: #{tpu_custom_call.1} parent=1 // pred_check
      _
    $region39: #{tpu_custom_call.1} parent=1 // pred_check_branch
      %64 = sbr.rel (0) target = $region41
    $region40: #{tpu_custom_call.1} parent=1 // pred_region
      %66 = dma.done [#allocation12], 512
    $region41: #{tpu_custom_call.1} parent=1 // pred_fallthru
      _
    %p67 = scmp.eq.s32.totalorder 0, 0
    // Predicated region
    $region42: #{tpu_custom_call.1} parent=1 // pred_check
      %p68 = pneg %p67
    $region43: #{tpu_custom_call.1} parent=1 // pred_check_branch
      %70 = sbr.rel (%p68) target = $region45
    $region44: #{tpu_custom_call.1} parent=1 // pred_region
      %v71 = vld [vmem:[%s4] sm:$0xff]
      %vm72 = vcmask 261120
      %73 = vst.msk [vmem:[#allocation2] sm:$0xff] %vm72, %v71
      %v74 = vld [vmem:[%s5] sm:$0xff]
      %75 = vst.msk [vmem:[#allocation3] sm:$0xff] %vm72, %v74
      %vm76 = vcmask 7168
      %77 = vst.msk [vmem:[#allocation4] sm:$0xff] %vm76, 1.0
      %v78 = vld [vmem:[%s7] sm:$0xff]
      %79 = vst.msk [vmem:[#allocation5] sm:$0xff] %vm76, %v78
      %v80 = vld [vmem:[%s6] sm:$0xff]
      %81 = vst.msk [vmem:[#allocation6] sm:$0xff] %vm76, %v80
    $region45: #{tpu_custom_call.1} parent=1 // pred_fallthru
      _
    %v82 = vld [vmem:[#allocation11] sm:$0xff]
    %v83 = vld [vmem:[#allocation11 + $0x8] sm:$0xff]
    %v84 = vld [vmem:[#allocation11 + $0x10] sm:$0xff]
    %v85 = vld [vmem:[#allocation11 + $0x18] sm:$0xff]
    %v86 = vld [vmem:[%s2] sm:$0x1]
    %v87 = vld [vmem:[#allocation7] sm:$0x1]
    %v88 = vld [vmem:[#allocation2] sm:$0xff]
    %v89 = vld [vmem:[#allocation3] sm:$0xff]
    %v90 = vld [vmem:[#allocation4] sm:$0xff]
    %v91 = vld [vmem:[#allocation5] sm:$0xff]
    %v92 = vld [vmem:[#allocation6] sm:$0xff]
    %v93 = vround.ne.pseudo %v90
    %v94 = vld [vmem:[#allocation8] sm:$0xff]
    %vm95 = vcmask 261120
    %v97 = vsel %vm95, %v88, 0
    %99 = vmatpush.msra.mxu0 0.0
    %100 = vmatpush.msra.mxu0 0.0
    %101 = vmatpush.msra.mxu0 0.0
    %102 = vmatpush.msra.mxu0 0.0
    %103 = vmatpush.msra.mxu0 0.0
    %104 = vmatpush.msra.mxu0 0.0
    %105 = vmatpush.msra.mxu0 0.0
    %106 = vmatpush.msra.mxu0 0.0
    %107 = vmatpush.msra.mxu0 0.0
    %108 = vmatpush.msra.mxu0 0.0
    %109 = vmatpush.msra.mxu0 0.0
    %110 = vmatpush.msra.mxu0 0.0
    %111 = vmatpush.msra.mxu0 %v85
    %112 = vmatpush.msra.mxu0 %v84
    %113 = vmatpush.msra.mxu0 %v83
    %114 = vmatpush.msra.mxu0 %v82
    %115 = vmatmul.f32.gmra.mxu0 %v97
    %v116 = vpop.f32.mrf.mxu0
    %v117 = vadd.f32 0.0, %v116
    %118 = vdwg.mxu0
    %v119 = vadd.f32 %v94, %v117
    %v120 = vxor.u32 %v119, 2147483648
    %v121 = vmul.f32 %v120, 1.442695
    %v122 = vpow.pop %v121
    %v123 = vadd.f32 %v122, 1.0
    %v124 = vrcp.pop %v123
    %v125 = vmul.f32 %v123, %v124
    %v126 = vsub.f32 1.0, %v125
    %v127 = vmul.f32 %v124, %v126
    %v128 = vadd.f32 %v124, %v127
    %vm129 = vweird.f32 %v123
    %vm130 = vweird.f32 %v124
    %vm131 = vmor %vm129, %vm130
    %v132 = vsel %vm131, %v124, %v128
    %v133 = vand.u32 2147483647, %v123
    %vm134 = vcmp.eq.f32.partialorder %v133, 8.507059e+37
    %v135 = vand.u32 %v123, 2147483648
    %v136 = vor.u32 1.1754944e-38, %v135
    %v137 = vsel %vm134, %v136, %v132
    %v138 = vmul.f32 1.0, %v137
    %v139 = vtanh.pop %v119
    %v140 = vmul.f32 %v89, %v138
    %142 = vrot.lane.b32.xlu0 %v138, 64
    %v143 = vpop.permute.xlu0 %142
    %v145 = vmul.f32 %v139, %v143
    %147 = vrot.lane.b32.xlu0 %v145, 32
    %v148 = vpop.permute.xlu0 %147
    %v150 = vadd.f32 %v140, %v148
    %v151 = vtanh.pop %v150
    %153 = vrot.lane.b32.xlu0 %v151, 64
    %v154 = vpop.permute.xlu0 %153
    %v156 = vmul.f32 %v138, %v154
    %vm157 = vcmp.gt.f32.partialorder %v92, 0.5
    %v158 = vsub.f32 1.0, %v93
    %v159 = vsel %vm157, %v158, %v93
    %v160 = vsel %vm157, 1, 0
    %161 = vset.pattern.permute.xlu0 0
    %162 = vperm.xlu0 %161, %v160
    %v163 = vpop.permute.xlu0 %162
    %vm164 = vcmp.eq.s32.totalorder %v163, 1
    %166 = vrot.lane.b32.xlu0 %v156, 64
    %v167 = vpop.permute.xlu0 %166
    %v169 = vsel %vm164, %v88, %v167
    %171 = vset.pattern.permute.xlu0 0
    %172 = vperm.xlu0 %171, %v159
    %v173 = vpop.permute.xlu0 %172
    %v175 = vmul.f32 %v169, %v173
    %v176 = vsel %vm164, %v89, %v150
    %v177 = vmul.f32 %v176, %v173
    %v179 = vperm.slane %v86, 0
    %v181 = vmul.f32 %v177, %v179
    %v182 = vsel %vm95, %v181, 0.0
    %183 = vadd.xlane.f32.xlu0 %v182
    %v184 = vpop.xlane.xlu0 %183
    %v186 = vperm.slane %v87, 0
    %v188 = vadd.f32 %v184, %v186
    %v189 = vxor.u32 %v188, 2147483648
    %v190 = vmul.f32 %v189, 1.442695
    %v191 = vpow.pop %v190
    %v192 = vadd.f32 %v191, 1.0
    %v193 = vrcp.pop %v192
    %v194 = vmul.f32 %v192, %v193
    %v195 = vsub.f32 1.0, %v194
    %v196 = vmul.f32 %v193, %v195
    %v197 = vadd.f32 %v193, %v196
    %vm198 = vweird.f32 %v192
    %vm199 = vweird.f32 %v193
    %vm200 = vmor %vm198, %vm199
    %v201 = vsel %vm200, %v193, %v197
    %v202 = vand.u32 2147483647, %v192
    %vm203 = vcmp.eq.f32.partialorder %v202, 8.507059e+37
    %v204 = vand.u32 %v192, 2147483648
    %v205 = vor.u32 1.1754944e-38, %v204
    %v206 = vsel %vm203, %v205, %v201
    %v207 = vmul.f32 1.0, %v206
    %v208 = vsel %vm157, %v91, %v207
    %v209 = vadd.f32 %v90, %v91
    %v210 = vmax.f32 %v209, 0.0
    %v211 = vmin.f32 %v210, 1.0
    %v212 = vmul.f32 %v211, %v158
    %v213 = vmul.f32 %v207, %v93
    %v214 = vsel %vm157, %v212, %v213
    %v215 = vrcp.pop %v214
    %v216 = vmul.f32 %v214, %v215
    %v217 = vsub.f32 1.0, %v216
    %v218 = vmul.f32 %v215, %v217
    %v219 = vadd.f32 %v215, %v218
    %vm220 = vweird.f32 %v214
    %vm221 = vweird.f32 %v215
    %vm222 = vmor %vm220, %vm221
    %v223 = vsel %vm222, %v215, %v219
    %v224 = vand.u32 2147483647, %v214
    %vm225 = vcmp.eq.f32.partialorder %v224, 8.507059e+37
    %v226 = vand.u32 %v214, 2147483648
    %v227 = vor.u32 1.1754944e-38, %v226
    %v228 = vsel %vm225, %v227, %v223
    %v229 = vmul.f32 0.5, %v228
    %v230 = vceil.f32 %v229
    %v231 = vsub.f32 %v230, 1.0
    %vm232 = vcmp.gt.f32.partialorder %v231, 0.0
    %v233 = vsel %vm232, 1, 0
    %v234 = vcvt.s32.f32 %v233
    %235 = vst.msk [vmem:[#allocation13] sm:$0xff] %vm95, %v175
    %v236 = vround.ne.pseudo %v214
    %s237 = scalar_lea.vmem [#allocation8], 8
    %v238 = vld [vmem:[%s237] sm:$0xff]
    %v240 = vsel %vm95, %v175, 0
    %242 = vmatpush.msra.mxu0 0.0
    %243 = vmatpush.msra.mxu0 0.0
    %244 = vmatpush.msra.mxu0 0.0
    %245 = vmatpush.msra.mxu0 0.0
    %246 = vmatpush.msra.mxu0 0.0
    %247 = vmatpush.msra.mxu0 0.0
    %248 = vmatpush.msra.mxu0 0.0
    %249 = vmatpush.msra.mxu0 0.0
    %250 = vmatpush.msra.mxu0 0.0
    %251 = vmatpush.msra.mxu0 0.0
    %252 = vmatpush.msra.mxu0 0.0
    %253 = vmatpush.msra.mxu0 0.0
    %254 = vmatpush.msra.mxu0 %v85
    %255 = vmatpush.msra.mxu0 %v84
    %256 = vmatpush.msra.mxu0 %v83
    %257 = vmatpush.msra.mxu0 %v82
    %258 = vmatmul.f32.gmra.mxu0 %v240
    %v259 = vpop.f32.mrf.mxu0
    %v260 = vadd.f32 0.0, %v259
    %261 = vdwg.mxu0
    %v262 = vadd.f32 %v238, %v260
    %v263 = vxor.u32 %v262, 2147483648
    %v264 = vmul.f32 %v263, 1.442695
    %v265 = vpow.pop %v264
    %v266 = vadd.f32 %v265, 1.0
    %v267 = vrcp.pop %v266
    %v268 = vmul.f32 %v266, %v267
    %v269 = vsub.f32 1.0, %v268
    %v270 = vmul.f32 %v267, %v269
    %v271 = vadd.f32 %v267, %v270
    %vm272 = vweird.f32 %v266
    %vm273 = vweird.f32 %v267
    %vm274 = vmor %vm272, %vm273
    %v275 = vsel %vm274, %v267, %v271
    %v276 = vand.u32 2147483647, %v266
    %vm277 = vcmp.eq.f32.partialorder %v276, 8.507059e+37
    %v278 = vand.u32 %v266, 2147483648
    %v279 = vor.u32 1.1754944e-38, %v278
    %v280 = vsel %vm277, %v279, %v275
    %v281 = vmul.f32 1.0, %v280
    %v282 = vtanh.pop %v262
    %v283 = vmul.f32 %v177, %v281
    %285 = vrot.lane.b32.xlu0 %v281, 64
    %v286 = vpop.permute.xlu0 %285
    %v288 = vmul.f32 %v282, %v286
    %290 = vrot.lane.b32.xlu0 %v288, 32
    %v291 = vpop.permute.xlu0 %290
    %v293 = vadd.f32 %v283, %v291
    %v294 = vtanh.pop %v293
    %296 = vrot.lane.b32.xlu0 %v294, 64
    %v297 = vpop.permute.xlu0 %296
    %v299 = vmul.f32 %v281, %v297
    %vm300 = vcmp.gt.f32.partialorder %v234, 0.5
    %v301 = vsub.f32 1.0, %v236
    %v302 = vsel %vm300, %v301, %v236
    %v303 = vsel %vm300, 1, 0
    %304 = vset.pattern.permute.xlu0 0
    %305 = vperm.xlu0 %304, %v303
    %v306 = vpop.permute.xlu0 %305
    %vm307 = vcmp.eq.s32.totalorder %v306, 1
    %309 = vrot.lane.b32.xlu0 %v299, 64
    %v310 = vpop.permute.xlu0 %309
    %v312 = vsel %vm307, %v175, %v310
    %314 = vset.pattern.permute.xlu0 0
    %315 = vperm.xlu0 %314, %v302
    %v316 = vpop.permute.xlu0 %315
    %v318 = vmul.f32 %v312, %v316
    %v319 = vsel %vm307, %v177, %v293
    %v320 = vmul.f32 %v319, %v316
    %v321 = vmul.f32 %v320, %v179
    %v322 = vsel %vm95, %v321, 0.0
    %323 = vadd.xlane.f32.xlu0 %v322
    %v324 = vpop.xlane.xlu0 %323
    %v325 = vadd.f32 %v324, %v186
    %v326 = vxor.u32 %v325, 2147483648
    %v327 = vmul.f32 %v326, 1.442695
    %v328 = vpow.pop %v327
    %v329 = vadd.f32 %v328, 1.0
    %v330 = vrcp.pop %v329
    %v331 = vmul.f32 %v329, %v330
    %v332 = vsub.f32 1.0, %v331
    %v333 = vmul.f32 %v330, %v332
    %v334 = vadd.f32 %v330, %v333
    %vm335 = vweird.f32 %v329
    %vm336 = vweird.f32 %v330
    %vm337 = vmor %vm335, %vm336
    %v338 = vsel %vm337, %v330, %v334
    %v339 = vand.u32 2147483647, %v329
    %vm340 = vcmp.eq.f32.partialorder %v339, 8.507059e+37
    %v341 = vand.u32 %v329, 2147483648
    %v342 = vor.u32 1.1754944e-38, %v341
    %v343 = vsel %vm340, %v342, %v338
    %v344 = vmul.f32 1.0, %v343
    %v345 = vsel %vm300, %v208, %v344
    %v346 = vadd.f32 %v214, %v208
    %v347 = vmax.f32 %v346, 0.0
    %v348 = vmin.f32 %v347, 1.0
    %v349 = vmul.f32 %v348, %v301
    %v350 = vmul.f32 %v344, %v236
    %v351 = vsel %vm300, %v349, %v350
    %v352 = vrcp.pop %v351
    %v353 = vmul.f32 %v351, %v352
    %v354 = vsub.f32 1.0, %v353
    %v355 = vmul.f32 %v352, %v354
    %v356 = vadd.f32 %v352, %v355
    %vm357 = vweird.f32 %v351
    %vm358 = vweird.f32 %v352
    %vm359 = vmor %vm357, %vm358
    %v360 = vsel %vm359, %v352, %v356
    %v361 = vand.u32 2147483647, %v351
    %vm362 = vcmp.eq.f32.partialorder %v361, 8.507059e+37
    %v363 = vand.u32 %v351, 2147483648
    %v364 = vor.u32 1.1754944e-38, %v363
    %v365 = vsel %vm362, %v364, %v360
    %v366 = vmul.f32 0.5, %v365
    %v367 = vceil.f32 %v366
    %v368 = vsub.f32 %v367, 1.0
    %vm369 = vcmp.gt.f32.partialorder %v368, 0.0
    %v370 = vsel %vm369, 1, 0
    %v371 = vcvt.s32.f32 %v370
    %s372 = scalar_lea.vmem [#allocation13], 8
    %373 = vst.msk [vmem:[%s372] sm:$0xff] %vm95, %v318
    %v374 = vround.ne.pseudo %v351
    %s375 = scalar_lea.vmem [#allocation8], 16
    %v376 = vld [vmem:[%s375] sm:$0xff]
    %v378 = vsel %vm95, %v318, 0
    %380 = vmatpush.msra.mxu0 0.0
    %381 = vmatpush.msra.mxu0 0.0
    %382 = vmatpush.msra.mxu0 0.0
    %383 = vmatpush.msra.mxu0 0.0
    %384 = vmatpush.msra.mxu0 0.0
    %385 = vmatpush.msra.mxu0 0.0
    %386 = vmatpush.msra.mxu0 0.0
    %387 = vmatpush.msra.mxu0 0.0
    %388 = vmatpush.msra.mxu0 0.0
    %389 = vmatpush.msra.mxu0 0.0
    %390 = vmatpush.msra.mxu0 0.0
    %391 = vmatpush.msra.mxu0 0.0
    %392 = vmatpush.msra.mxu0 %v85
    %393 = vmatpush.msra.mxu0 %v84
    %394 = vmatpush.msra.mxu0 %v83
    %395 = vmatpush.msra.mxu0 %v82
    %396 = vmatmul.f32.gmra.mxu0 %v378
    %v397 = vpop.f32.mrf.mxu0
    %v398 = vadd.f32 0.0, %v397
    %399 = vdwg.mxu0
    %v400 = vadd.f32 %v376, %v398
    %v401 = vxor.u32 %v400, 2147483648
    %v402 = vmul.f32 %v401, 1.442695
    %v403 = vpow.pop %v402
    %v404 = vadd.f32 %v403, 1.0
    %v405 = vrcp.pop %v404
    %v406 = vmul.f32 %v404, %v405
    %v407 = vsub.f32 1.0, %v406
    %v408 = vmul.f32 %v405, %v407
    %v409 = vadd.f32 %v405, %v408
    %vm410 = vweird.f32 %v404
    %vm411 = vweird.f32 %v405
    %vm412 = vmor %vm410, %vm411
    %v413 = vsel %vm412, %v405, %v409
    %v414 = vand.u32 2147483647, %v404
    %vm415 = vcmp.eq.f32.partialorder %v414, 8.507059e+37
    %v416 = vand.u32 %v404, 2147483648
    %v417 = vor.u32 1.1754944e-38, %v416
    %v418 = vsel %vm415, %v417, %v413
    %v419 = vmul.f32 1.0, %v418
    %v420 = vtanh.pop %v400
    %v421 = vmul.f32 %v320, %v419
    %423 = vrot.lane.b32.xlu0 %v419, 64
    %v424 = vpop.permute.xlu0 %423
    %v426 = vmul.f32 %v420, %v424
    %428 = vrot.lane.b32.xlu0 %v426, 32
    %v429 = vpop.permute.xlu0 %428
    %v431 = vadd.f32 %v421, %v429
    %v432 = vtanh.pop %v431
    %434 = vrot.lane.b32.xlu0 %v432, 64
    %v435 = vpop.permute.xlu0 %434
    %v437 = vmul.f32 %v419, %v435
    %vm438 = vcmp.gt.f32.partialorder %v371, 0.5
    %v439 = vsub.f32 1.0, %v374
    %v440 = vsel %vm438, %v439, %v374
    %v441 = vsel %vm438, 1, 0
    %442 = vset.pattern.permute.xlu0 0
    %443 = vperm.xlu0 %442, %v441
    %v444 = vpop.permute.xlu0 %443
    %vm445 = vcmp.eq.s32.totalorder %v444, 1
    %447 = vrot.lane.b32.xlu0 %v437, 64
    %v448 = vpop.permute.xlu0 %447
    %v450 = vsel %vm445, %v318, %v448
    %452 = vset.pattern.permute.xlu0 0
    %453 = vperm.xlu0 %452, %v440
    %v454 = vpop.permute.xlu0 %453
    %v456 = vmul.f32 %v450, %v454
    %v457 = vsel %vm445, %v320, %v431
    %v458 = vmul.f32 %v457, %v454
    %v459 = vmul.f32 %v458, %v179
    %v460 = vsel %vm95, %v459, 0.0
    %461 = vadd.xlane.f32.xlu0 %v460
    %v462 = vpop.xlane.xlu0 %461
    %v463 = vadd.f32 %v462, %v186
    %v464 = vxor.u32 %v463, 2147483648
    %v465 = vmul.f32 %v464, 1.442695
    %v466 = vpow.pop %v465
    %v467 = vadd.f32 %v466, 1.0
    %v468 = vrcp.pop %v467
    %v469 = vmul.f32 %v467, %v468
    %v470 = vsub.f32 1.0, %v469
    %v471 = vmul.f32 %v468, %v470
    %v472 = vadd.f32 %v468, %v471
    %vm473 = vweird.f32 %v467
    %vm474 = vweird.f32 %v468
    %vm475 = vmor %vm473, %vm474
    %v476 = vsel %vm475, %v468, %v472
    %v477 = vand.u32 2147483647, %v467
    %vm478 = vcmp.eq.f32.partialorder %v477, 8.507059e+37
    %v479 = vand.u32 %v467, 2147483648
    %v480 = vor.u32 1.1754944e-38, %v479
    %v481 = vsel %vm478, %v480, %v476
    %v482 = vmul.f32 1.0, %v481
    %v483 = vsel %vm438, %v345, %v482
    %v484 = vadd.f32 %v351, %v345
    %v485 = vmax.f32 %v484, 0.0
    %v486 = vmin.f32 %v485, 1.0
    %v487 = vmul.f32 %v486, %v439
    %v488 = vmul.f32 %v482, %v374
    %v489 = vsel %vm438, %v487, %v488
    %v490 = vrcp.pop %v489
    %v491 = vmul.f32 %v489, %v490
    %v492 = vsub.f32 1.0, %v491
    %v493 = vmul.f32 %v490, %v492
    %v494 = vadd.f32 %v490, %v493
    %vm495 = vweird.f32 %v489
    %vm496 = vweird.f32 %v490
    %vm497 = vmor %vm495, %vm496
    %v498 = vsel %vm497, %v490, %v494
    %v499 = vand.u32 2147483647, %v489
    %vm500 = vcmp.eq.f32.partialorder %v499, 8.507059e+37
    %v501 = vand.u32 %v489, 2147483648
    %v502 = vor.u32 1.1754944e-38, %v501
    %v503 = vsel %vm500, %v502, %v498
    %v504 = vmul.f32 0.5, %v503
    %v505 = vceil.f32 %v504
    %v506 = vsub.f32 %v505, 1.0
    %vm507 = vcmp.gt.f32.partialorder %v506, 0.0
    %v508 = vsel %vm507, 1, 0
    %v509 = vcvt.s32.f32 %v508
    %s510 = scalar_lea.vmem [#allocation13], 16
    %511 = vst.msk [vmem:[%s510] sm:$0xff] %vm95, %v456
    %v512 = vround.ne.pseudo %v489
    %s513 = scalar_lea.vmem [#allocation8], 24
    %v514 = vld [vmem:[%s513] sm:$0xff]
    %v516 = vsel %vm95, %v456, 0
    %518 = vmatpush.msra.mxu0 0.0
    %519 = vmatpush.msra.mxu0 0.0
    %520 = vmatpush.msra.mxu0 0.0
    %521 = vmatpush.msra.mxu0 0.0
    %522 = vmatpush.msra.mxu0 0.0
    %523 = vmatpush.msra.mxu0 0.0
    %524 = vmatpush.msra.mxu0 0.0
    %525 = vmatpush.msra.mxu0 0.0
    %526 = vmatpush.msra.mxu0 0.0
    %527 = vmatpush.msra.mxu0 0.0
    %528 = vmatpush.msra.mxu0 0.0
    %529 = vmatpush.msra.mxu0 0.0
    %530 = vmatpush.msra.mxu0 %v85
    %531 = vmatpush.msra.mxu0 %v84
    %532 = vmatpush.msra.mxu0 %v83
    %533 = vmatpush.msra.mxu0 %v82
    %534 = vmatmul.f32.gmra.mxu0 %v516
    %v535 = vpop.f32.mrf.mxu0
    %v536 = vadd.f32 0.0, %v535
    %537 = vdwg.mxu0
    %v538 = vadd.f32 %v514, %v536
    %v539 = vxor.u32 %v538, 2147483648
    %v540 = vmul.f32 %v539, 1.442695
    %v541 = vpow.pop %v540
    %v542 = vadd.f32 %v541, 1.0
    %v543 = vrcp.pop %v542
    %v544 = vmul.f32 %v542, %v543
    %v545 = vsub.f32 1.0, %v544
    %v546 = vmul.f32 %v543, %v545
    %v547 = vadd.f32 %v543, %v546
    %vm548 = vweird.f32 %v542
    %vm549 = vweird.f32 %v543
    %vm550 = vmor %vm548, %vm549
    %v551 = vsel %vm550, %v543, %v547
    %v552 = vand.u32 2147483647, %v542
    %vm553 = vcmp.eq.f32.partialorder %v552, 8.507059e+37
    %v554 = vand.u32 %v542, 2147483648
    %v555 = vor.u32 1.1754944e-38, %v554
    %v556 = vsel %vm553, %v555, %v551
    %v557 = vmul.f32 1.0, %v556
    %v558 = vtanh.pop %v538
    %v559 = vmul.f32 %v458, %v557
    %561 = vrot.lane.b32.xlu0 %v557, 64
    %v562 = vpop.permute.xlu0 %561
    %v564 = vmul.f32 %v558, %v562
    %566 = vrot.lane.b32.xlu0 %v564, 32
    %v567 = vpop.permute.xlu0 %566
    %v569 = vadd.f32 %v559, %v567
    %v570 = vtanh.pop %v569
    %572 = vrot.lane.b32.xlu0 %v570, 64
    %v573 = vpop.permute.xlu0 %572
    %v575 = vmul.f32 %v557, %v573
    %vm576 = vcmp.gt.f32.partialorder %v509, 0.5
    %v577 = vsub.f32 1.0, %v512
    %v578 = vsel %vm576, %v577, %v512
    %v579 = vsel %vm576, 1, 0
    %580 = vset.pattern.permute.xlu0 0
    %581 = vperm.xlu0 %580, %v579
    %v582 = vpop.permute.xlu0 %581
    %vm583 = vcmp.eq.s32.totalorder %v582, 1
    %585 = vrot.lane.b32.xlu0 %v575, 64
    %v586 = vpop.permute.xlu0 %585
    %v588 = vsel %vm583, %v456, %v586
    %590 = vset.pattern.permute.xlu0 0
    %591 = vperm.xlu0 %590, %v578
    %v592 = vpop.permute.xlu0 %591
    %v594 = vmul.f32 %v588, %v592
    %v595 = vsel %vm583, %v458, %v569
    %v596 = vmul.f32 %v595, %v592
    %v597 = vmul.f32 %v596, %v179
    %v598 = vsel %vm95, %v597, 0.0
    %599 = vadd.xlane.f32.xlu0 %v598
    %v600 = vpop.xlane.xlu0 %599
    %v601 = vadd.f32 %v600, %v186
    %v602 = vxor.u32 %v601, 2147483648
    %v603 = vmul.f32 %v602, 1.442695
    %v604 = vpow.pop %v603
    %v605 = vadd.f32 %v604, 1.0
    %v606 = vrcp.pop %v605
    %v607 = vmul.f32 %v605, %v606
    %v608 = vsub.f32 1.0, %v607
    %v609 = vmul.f32 %v606, %v608
    %v610 = vadd.f32 %v606, %v609
    %vm611 = vweird.f32 %v605
    %vm612 = vweird.f32 %v606
    %vm613 = vmor %vm611, %vm612
    %v614 = vsel %vm613, %v606, %v610
    %v615 = vand.u32 2147483647, %v605
    %vm616 = vcmp.eq.f32.partialorder %v615, 8.507059e+37
    %v617 = vand.u32 %v605, 2147483648
    %v618 = vor.u32 1.1754944e-38, %v617
    %v619 = vsel %vm616, %v618, %v614
    %v620 = vmul.f32 1.0, %v619
    %v621 = vsel %vm576, %v483, %v620
    %v622 = vadd.f32 %v489, %v483
    %v623 = vmax.f32 %v622, 0.0
    %v624 = vmin.f32 %v623, 1.0
    %v625 = vmul.f32 %v624, %v577
    %v626 = vmul.f32 %v620, %v512
    %v627 = vsel %vm576, %v625, %v626
    %v628 = vrcp.pop %v627
    %v629 = vmul.f32 %v627, %v628
    %v630 = vsub.f32 1.0, %v629
    %v631 = vmul.f32 %v628, %v630
    %v632 = vadd.f32 %v628, %v631
    %vm633 = vweird.f32 %v627
    %vm634 = vweird.f32 %v628
    %vm635 = vmor %vm633, %vm634
    %v636 = vsel %vm635, %v628, %v632
    %v637 = vand.u32 2147483647, %v627
    %vm638 = vcmp.eq.f32.partialorder %v637, 8.507059e+37
    %v639 = vand.u32 %v627, 2147483648
    %v640 = vor.u32 1.1754944e-38, %v639
    %v641 = vsel %vm638, %v640, %v636
    %v642 = vmul.f32 0.5, %v641
    %v643 = vceil.f32 %v642
    %v644 = vsub.f32 %v643, 1.0
    %vm645 = vcmp.gt.f32.partialorder %v644, 0.0
    %v646 = vsel %vm645, 1, 0
    %v647 = vcvt.s32.f32 %v646
    %s648 = scalar_lea.vmem [#allocation13], 24
    %649 = vst.msk [vmem:[%s648] sm:$0xff] %vm95, %v594
    %v650 = vround.ne.pseudo %v627
    %s651 = scalar_lea.vmem [#allocation8], 32
    %v652 = vld [vmem:[%s651] sm:$0xff]
    %v654 = vsel %vm95, %v594, 0
    %656 = vmatpush.msra.mxu0 0.0
    %657 = vmatpush.msra.mxu0 0.0
    %658 = vmatpush.msra.mxu0 0.0
    %659 = vmatpush.msra.mxu0 0.0
    %660 = vmatpush.msra.mxu0 0.0
    %661 = vmatpush.msra.mxu0 0.0
    %662 = vmatpush.msra.mxu0 0.0
    %663 = vmatpush.msra.mxu0 0.0
    %664 = vmatpush.msra.mxu0 0.0
    %665 = vmatpush.msra.mxu0 0.0
    %666 = vmatpush.msra.mxu0 0.0
    %667 = vmatpush.msra.mxu0 0.0
    %668 = vmatpush.msra.mxu0 %v85
    %669 = vmatpush.msra.mxu0 %v84
    %670 = vmatpush.msra.mxu0 %v83
    %671 = vmatpush.msra.mxu0 %v82
    %672 = vmatmul.f32.gmra.mxu0 %v654
    %v673 = vpop.f32.mrf.mxu0
    %v674 = vadd.f32 0.0, %v673
    %675 = vdwg.mxu0
    %v676 = vadd.f32 %v652, %v674
    %v677 = vxor.u32 %v676, 2147483648
    %v678 = vmul.f32 %v677, 1.442695
    %v679 = vpow.pop %v678
    %v680 = vadd.f32 %v679, 1.0
    %v681 = vrcp.pop %v680
    %v682 = vmul.f32 %v680, %v681
    %v683 = vsub.f32 1.0, %v682
    %v684 = vmul.f32 %v681, %v683
    %v685 = vadd.f32 %v681, %v684
    %vm686 = vweird.f32 %v680
    %vm687 = vweird.f32 %v681
    %vm688 = vmor %vm686, %vm687
    %v689 = vsel %vm688, %v681, %v685
    %v690 = vand.u32 2147483647, %v680
    %vm691 = vcmp.eq.f32.partialorder %v690, 8.507059e+37
    %v692 = vand.u32 %v680, 2147483648
    %v693 = vor.u32 1.1754944e-38, %v692
    %v694 = vsel %vm691, %v693, %v689
    %v695 = vmul.f32 1.0, %v694
    %v696 = vtanh.pop %v676
    %v697 = vmul.f32 %v596, %v695
    %699 = vrot.lane.b32.xlu0 %v695, 64
    %v700 = vpop.permute.xlu0 %699
    %v702 = vmul.f32 %v696, %v700
    %704 = vrot.lane.b32.xlu0 %v702, 32
    %v705 = vpop.permute.xlu0 %704
    %v707 = vadd.f32 %v697, %v705
    %v708 = vtanh.pop %v707
    %710 = vrot.lane.b32.xlu0 %v708, 64
    %v711 = vpop.permute.xlu0 %710
    %v713 = vmul.f32 %v695, %v711
    %vm714 = vcmp.gt.f32.partialorder %v647, 0.5
    %v715 = vsub.f32 1.0, %v650
    %v716 = vsel %vm714, %v715, %v650
    %v717 = vsel %vm714, 1, 0
    %718 = vset.pattern.permute.xlu0 0
    %719 = vperm.xlu0 %718, %v717
    %v720 = vpop.permute.xlu0 %719
    %vm721 = vcmp.eq.s32.totalorder %v720, 1
    %723 = vrot.lane.b32.xlu0 %v713, 64
    %v724 = vpop.permute.xlu0 %723
    %v726 = vsel %vm721, %v594, %v724
    %728 = vset.pattern.permute.xlu0 0
    %729 = vperm.xlu0 %728, %v716
    %v730 = vpop.permute.xlu0 %729
    %v732 = vmul.f32 %v726, %v730
    %v733 = vsel %vm721, %v596, %v707
    %v734 = vmul.f32 %v733, %v730
    %v735 = vmul.f32 %v734, %v179
    %v736 = vsel %vm95, %v735, 0.0
    %737 = vadd.xlane.f32.xlu0 %v736
    %v738 = vpop.xlane.xlu0 %737
    %v739 = vadd.f32 %v738, %v186
    %v740 = vxor.u32 %v739, 2147483648
    %v741 = vmul.f32 %v740, 1.442695
    %v742 = vpow.pop %v741
    %v743 = vadd.f32 %v742, 1.0
    %v744 = vrcp.pop %v743
    %v745 = vmul.f32 %v743, %v744
    %v746 = vsub.f32 1.0, %v745
    %v747 = vmul.f32 %v744, %v746
    %v748 = vadd.f32 %v744, %v747
    %vm749 = vweird.f32 %v743
    %vm750 = vweird.f32 %v744
    %vm751 = vmor %vm749, %vm750
    %v752 = vsel %vm751, %v744, %v748
    %v753 = vand.u32 2147483647, %v743
    %vm754 = vcmp.eq.f32.partialorder %v753, 8.507059e+37
    %v755 = vand.u32 %v743, 2147483648
    %v756 = vor.u32 1.1754944e-38, %v755
    %v757 = vsel %vm754, %v756, %v752
    %v758 = vmul.f32 1.0, %v757
    %v759 = vsel %vm714, %v621, %v758
    %v760 = vadd.f32 %v627, %v621
    %v761 = vmax.f32 %v760, 0.0
    %v762 = vmin.f32 %v761, 1.0
    %v763 = vmul.f32 %v762, %v715
    %v764 = vmul.f32 %v758, %v650
    %v765 = vsel %vm714, %v763, %v764
    %v766 = vrcp.pop %v765
    %v767 = vmul.f32 %v765, %v766
    %v768 = vsub.f32 1.0, %v767
    %v769 = vmul.f32 %v766, %v768
    %v770 = vadd.f32 %v766, %v769
    %vm771 = vweird.f32 %v765
    %vm772 = vweird.f32 %v766
    %vm773 = vmor %vm771, %vm772
    %v774 = vsel %vm773, %v766, %v770
    %v775 = vand.u32 2147483647, %v765
    %vm776 = vcmp.eq.f32.partialorder %v775, 8.507059e+37
    %v777 = vand.u32 %v765, 2147483648
    %v778 = vor.u32 1.1754944e-38, %v777
    %v779 = vsel %vm776, %v778, %v774
    %v780 = vmul.f32 0.5, %v779
    %v781 = vceil.f32 %v780
    %v782 = vsub.f32 %v781, 1.0
    %vm783 = vcmp.gt.f32.partialorder %v782, 0.0
    %v784 = vsel %vm783, 1, 0
    %v785 = vcvt.s32.f32 %v784
    %s786 = scalar_lea.vmem [#allocation13], 32
    %787 = vst.msk [vmem:[%s786] sm:$0xff] %vm95, %v732
    %v788 = vround.ne.pseudo %v765
    %s789 = scalar_lea.vmem [#allocation8], 40
    %v790 = vld [vmem:[%s789] sm:$0xff]
    %v792 = vsel %vm95, %v732, 0
    %794 = vmatpush.msra.mxu0 0.0
    %795 = vmatpush.msra.mxu0 0.0
    %796 = vmatpush.msra.mxu0 0.0
    %797 = vmatpush.msra.mxu0 0.0
    %798 = vmatpush.msra.mxu0 0.0
    %799 = vmatpush.msra.mxu0 0.0
    %800 = vmatpush.msra.mxu0 0.0
    %801 = vmatpush.msra.mxu0 0.0
    %802 = vmatpush.msra.mxu0 0.0
    %803 = vmatpush.msra.mxu0 0.0
    %804 = vmatpush.msra.mxu0 0.0
    %805 = vmatpush.msra.mxu0 0.0
    %806 = vmatpush.msra.mxu0 %v85
    %807 = vmatpush.msra.mxu0 %v84
    %808 = vmatpush.msra.mxu0 %v83
    %809 = vmatpush.msra.mxu0 %v82
    %810 = vmatmul.f32.gmra.mxu0 %v792
    %v811 = vpop.f32.mrf.mxu0
    %v812 = vadd.f32 0.0, %v811
    %813 = vdwg.mxu0
    %v814 = vadd.f32 %v790, %v812
    %v815 = vxor.u32 %v814, 2147483648
    %v816 = vmul.f32 %v815, 1.442695
    %v817 = vpow.pop %v816
    %v818 = vadd.f32 %v817, 1.0
    %v819 = vrcp.pop %v818
    %v820 = vmul.f32 %v818, %v819
    %v821 = vsub.f32 1.0, %v820
    %v822 = vmul.f32 %v819, %v821
    %v823 = vadd.f32 %v819, %v822
    %vm824 = vweird.f32 %v818
    %vm825 = vweird.f32 %v819
    %vm826 = vmor %vm824, %vm825
    %v827 = vsel %vm826, %v819, %v823
    %v828 = vand.u32 2147483647, %v818
    %vm829 = vcmp.eq.f32.partialorder %v828, 8.507059e+37
    %v830 = vand.u32 %v818, 2147483648
    %v831 = vor.u32 1.1754944e-38, %v830
    %v832 = vsel %vm829, %v831, %v827
    %v833 = vmul.f32 1.0, %v832
    %v834 = vtanh.pop %v814
    %v835 = vmul.f32 %v734, %v833
    %837 = vrot.lane.b32.xlu0 %v833, 64
    %v838 = vpop.permute.xlu0 %837
    %v840 = vmul.f32 %v834, %v838
    %842 = vrot.lane.b32.xlu0 %v840, 32
    %v843 = vpop.permute.xlu0 %842
    %v845 = vadd.f32 %v835, %v843
    %v846 = vtanh.pop %v845
    %848 = vrot.lane.b32.xlu0 %v846, 64
    %v849 = vpop.permute.xlu0 %848
    %v851 = vmul.f32 %v833, %v849
    %vm852 = vcmp.gt.f32.partialorder %v785, 0.5
    %v853 = vsub.f32 1.0, %v788
    %v854 = vsel %vm852, %v853, %v788
    %v855 = vsel %vm852, 1, 0
    %856 = vset.pattern.permute.xlu0 0
    %857 = vperm.xlu0 %856, %v855
    %v858 = vpop.permute.xlu0 %857
    %vm859 = vcmp.eq.s32.totalorder %v858, 1
    %861 = vrot.lane.b32.xlu0 %v851, 64
    %v862 = vpop.permute.xlu0 %861
    %v864 = vsel %vm859, %v732, %v862
    %866 = vset.pattern.permute.xlu0 0
    %867 = vperm.xlu0 %866, %v854
    %v868 = vpop.permute.xlu0 %867
    %v870 = vmul.f32 %v864, %v868
    %v871 = vsel %vm859, %v734, %v845
    %v872 = vmul.f32 %v871, %v868
    %v873 = vmul.f32 %v872, %v179
    %v874 = vsel %vm95, %v873, 0.0
    %875 = vadd.xlane.f32.xlu0 %v874
    %v876 = vpop.xlane.xlu0 %875
    %v877 = vadd.f32 %v876, %v186
    %v878 = vxor.u32 %v877, 2147483648
    %v879 = vmul.f32 %v878, 1.442695
    %v880 = vpow.pop %v879
    %v881 = vadd.f32 %v880, 1.0
    %v882 = vrcp.pop %v881
    %v883 = vmul.f32 %v881, %v882
    %v884 = vsub.f32 1.0, %v883
    %v885 = vmul.f32 %v882, %v884
    %v886 = vadd.f32 %v882, %v885
    %vm887 = vweird.f32 %v881
    %vm888 = vweird.f32 %v882
    %vm889 = vmor %vm887, %vm888
    %v890 = vsel %vm889, %v882, %v886
    %v891 = vand.u32 2147483647, %v881
    %vm892 = vcmp.eq.f32.partialorder %v891, 8.507059e+37
    %v893 = vand.u32 %v881, 2147483648
    %v894 = vor.u32 1.1754944e-38, %v893
    %v895 = vsel %vm892, %v894, %v890
    %v896 = vmul.f32 1.0, %v895
    %v897 = vsel %vm852, %v759, %v896
    %v898 = vadd.f32 %v765, %v759
    %v899 = vmax.f32 %v898, 0.0
    %v900 = vmin.f32 %v899, 1.0
    %v901 = vmul.f32 %v900, %v853
    %v902 = vmul.f32 %v896, %v788
    %v903 = vsel %vm852, %v901, %v902
    %v904 = vrcp.pop %v903
    %v905 = vmul.f32 %v903, %v904
    %v906 = vsub.f32 1.0, %v905
    %v907 = vmul.f32 %v904, %v906
    %v908 = vadd.f32 %v904, %v907
    %vm909 = vweird.f32 %v903
    %vm910 = vweird.f32 %v904
    %vm911 = vmor %vm909, %vm910
    %v912 = vsel %vm911, %v904, %v908
    %v913 = vand.u32 2147483647, %v903
    %vm914 = vcmp.eq.f32.partialorder %v913, 8.507059e+37
    %v915 = vand.u32 %v903, 2147483648
    %v916 = vor.u32 1.1754944e-38, %v915
    %v917 = vsel %vm914, %v916, %v912
    %v918 = vmul.f32 0.5, %v917
    %v919 = vceil.f32 %v918
    %v920 = vsub.f32 %v919, 1.0
    %vm921 = vcmp.gt.f32.partialorder %v920, 0.0
    %v922 = vsel %vm921, 1, 0
    %v923 = vcvt.s32.f32 %v922
    %s924 = scalar_lea.vmem [#allocation13], 40
    %925 = vst.msk [vmem:[%s924] sm:$0xff] %vm95, %v870
    %v926 = vround.ne.pseudo %v903
    %s927 = scalar_lea.vmem [#allocation8], 48
    %v928 = vld [vmem:[%s927] sm:$0xff]
    %v930 = vsel %vm95, %v870, 0
    %932 = vmatpush.msra.mxu0 0.0
    %933 = vmatpush.msra.mxu0 0.0
    %934 = vmatpush.msra.mxu0 0.0
    %935 = vmatpush.msra.mxu0 0.0
    %936 = vmatpush.msra.mxu0 0.0
    %937 = vmatpush.msra.mxu0 0.0
    %938 = vmatpush.msra.mxu0 0.0
    %939 = vmatpush.msra.mxu0 0.0
    %940 = vmatpush.msra.mxu0 0.0
    %941 = vmatpush.msra.mxu0 0.0
    %942 = vmatpush.msra.mxu0 0.0
    %943 = vmatpush.msra.mxu0 0.0
    %944 = vmatpush.msra.mxu0 %v85
    %945 = vmatpush.msra.mxu0 %v84
    %946 = vmatpush.msra.mxu0 %v83
    %947 = vmatpush.msra.mxu0 %v82
    %948 = vmatmul.f32.gmra.mxu0 %v930
    %v949 = vpop.f32.mrf.mxu0
    %v950 = vadd.f32 0.0, %v949
    %951 = vdwg.mxu0
    %v952 = vadd.f32 %v928, %v950
    %v953 = vxor.u32 %v952, 2147483648
    %v954 = vmul.f32 %v953, 1.442695
    %v955 = vpow.pop %v954
    %v956 = vadd.f32 %v955, 1.0
    %v957 = vrcp.pop %v956
    %v958 = vmul.f32 %v956, %v957
    %v959 = vsub.f32 1.0, %v958
    %v960 = vmul.f32 %v957, %v959
    %v961 = vadd.f32 %v957, %v960
    %vm962 = vweird.f32 %v956
    %vm963 = vweird.f32 %v957
    %vm964 = vmor %vm962, %vm963
    %v965 = vsel %vm964, %v957, %v961
    %v966 = vand.u32 2147483647, %v956
    %vm967 = vcmp.eq.f32.partialorder %v966, 8.507059e+37
    %v968 = vand.u32 %v956, 2147483648
    %v969 = vor.u32 1.1754944e-38, %v968
    %v970 = vsel %vm967, %v969, %v965
    %v971 = vmul.f32 1.0, %v970
    %v972 = vtanh.pop %v952
    %v973 = vmul.f32 %v872, %v971
    %975 = vrot.lane.b32.xlu0 %v971, 64
    %v976 = vpop.permute.xlu0 %975
    %v978 = vmul.f32 %v972, %v976
    %980 = vrot.lane.b32.xlu0 %v978, 32
    %v981 = vpop.permute.xlu0 %980
    %v983 = vadd.f32 %v973, %v981
    %v984 = vtanh.pop %v983
    %986 = vrot.lane.b32.xlu0 %v984, 64
    %v987 = vpop.permute.xlu0 %986
    %v989 = vmul.f32 %v971, %v987
    %vm990 = vcmp.gt.f32.partialorder %v923, 0.5
    %v991 = vsub.f32 1.0, %v926
    %v992 = vsel %vm990, %v991, %v926
    %v993 = vsel %vm990, 1, 0
    %994 = vset.pattern.permute.xlu0 0
    %995 = vperm.xlu0 %994, %v993
    %v996 = vpop.permute.xlu0 %995
    %vm997 = vcmp.eq.s32.totalorder %v996, 1
    %999 = vrot.lane.b32.xlu0 %v989, 64
    %v1000 = vpop.permute.xlu0 %999
    %v1002 = vsel %vm997, %v870, %v1000
    %1004 = vset.pattern.permute.xlu0 0
    %1005 = vperm.xlu0 %1004, %v992
    %v1006 = vpop.permute.xlu0 %1005
    %v1008 = vmul.f32 %v1002, %v1006
    %v1009 = vsel %vm997, %v872, %v983
    %v1010 = vmul.f32 %v1009, %v1006
    %v1011 = vmul.f32 %v1010, %v179
    %v1012 = vsel %vm95, %v1011, 0.0
    %1013 = vadd.xlane.f32.xlu0 %v1012
    %v1014 = vpop.xlane.xlu0 %1013
    %v1015 = vadd.f32 %v1014, %v186
    %v1016 = vxor.u32 %v1015, 2147483648
    %v1017 = vmul.f32 %v1016, 1.442695
    %v1018 = vpow.pop %v1017
    %v1019 = vadd.f32 %v1018, 1.0
    %v1020 = vrcp.pop %v1019
    %v1021 = vmul.f32 %v1019, %v1020
    %v1022 = vsub.f32 1.0, %v1021
    %v1023 = vmul.f32 %v1020, %v1022
    %v1024 = vadd.f32 %v1020, %v1023
    %vm1025 = vweird.f32 %v1019
    %vm1026 = vweird.f32 %v1020
    %vm1027 = vmor %vm1025, %vm1026
    %v1028 = vsel %vm1027, %v1020, %v1024
    %v1029 = vand.u32 2147483647, %v1019
    %vm1030 = vcmp.eq.f32.partialorder %v1029, 8.507059e+37
    %v1031 = vand.u32 %v1019, 2147483648
    %v1032 = vor.u32 1.1754944e-38, %v1031
    %v1033 = vsel %vm1030, %v1032, %v1028
    %v1034 = vmul.f32 1.0, %v1033
    %v1035 = vsel %vm990, %v897, %v1034
    %v1036 = vadd.f32 %v903, %v897
    %v1037 = vmax.f32 %v1036, 0.0
    %v1038 = vmin.f32 %v1037, 1.0
    %v1039 = vmul.f32 %v1038, %v991
    %v1040 = vmul.f32 %v1034, %v926
    %v1041 = vsel %vm990, %v1039, %v1040
    %v1042 = vrcp.pop %v1041
    %v1043 = vmul.f32 %v1041, %v1042
    %v1044 = vsub.f32 1.0, %v1043
    %v1045 = vmul.f32 %v1042, %v1044
    %v1046 = vadd.f32 %v1042, %v1045
    %vm1047 = vweird.f32 %v1041
    %vm1048 = vweird.f32 %v1042
    %vm1049 = vmor %vm1047, %vm1048
    %v1050 = vsel %vm1049, %v1042, %v1046
    %v1051 = vand.u32 2147483647, %v1041
    %vm1052 = vcmp.eq.f32.partialorder %v1051, 8.507059e+37
    %v1053 = vand.u32 %v1041, 2147483648
    %v1054 = vor.u32 1.1754944e-38, %v1053
    %v1055 = vsel %vm1052, %v1054, %v1050
    %v1056 = vmul.f32 0.5, %v1055
    %v1057 = vceil.f32 %v1056
    %v1058 = vsub.f32 %v1057, 1.0
    %vm1059 = vcmp.gt.f32.partialorder %v1058, 0.0
    %v1060 = vsel %vm1059, 1, 0
    %v1061 = vcvt.s32.f32 %v1060
    %s1062 = scalar_lea.vmem [#allocation13], 48
    %1063 = vst.msk [vmem:[%s1062] sm:$0xff] %vm95, %v1008
    %v1064 = vround.ne.pseudo %v1041
    %s1065 = scalar_lea.vmem [#allocation8], 56
    %v1066 = vld [vmem:[%s1065] sm:$0xff]
    %v1068 = vsel %vm95, %v1008, 0
    %1070 = vmatpush.msra.mxu0 0.0
    %1071 = vmatpush.msra.mxu0 0.0
    %1072 = vmatpush.msra.mxu0 0.0
    %1073 = vmatpush.msra.mxu0 0.0
    %1074 = vmatpush.msra.mxu0 0.0
    %1075 = vmatpush.msra.mxu0 0.0
    %1076 = vmatpush.msra.mxu0 0.0
    %1077 = vmatpush.msra.mxu0 0.0
    %1078 = vmatpush.msra.mxu0 0.0
    %1079 = vmatpush.msra.mxu0 0.0
    %1080 = vmatpush.msra.mxu0 0.0
    %1081 = vmatpush.msra.mxu0 0.0
    %1082 = vmatpush.msra.mxu0 %v85
    %1083 = vmatpush.msra.mxu0 %v84
    %1084 = vmatpush.msra.mxu0 %v83
    %1085 = vmatpush.msra.mxu0 %v82
    %1086 = vmatmul.f32.gmra.mxu0 %v1068
    %v1087 = vpop.f32.mrf.mxu0
    %v1088 = vadd.f32 0.0, %v1087
    %1089 = vdwg.mxu0
    %v1090 = vadd.f32 %v1066, %v1088
    %v1091 = vxor.u32 %v1090, 2147483648
    %v1092 = vmul.f32 %v1091, 1.442695
    %v1093 = vpow.pop %v1092
    %v1094 = vadd.f32 %v1093, 1.0
    %v1095 = vrcp.pop %v1094
    %v1096 = vmul.f32 %v1094, %v1095
    %v1097 = vsub.f32 1.0, %v1096
    %v1098 = vmul.f32 %v1095, %v1097
    %v1099 = vadd.f32 %v1095, %v1098
    %vm1100 = vweird.f32 %v1094
    %vm1101 = vweird.f32 %v1095
    %vm1102 = vmor %vm1100, %vm1101
    %v1103 = vsel %vm1102, %v1095, %v1099
    %v1104 = vand.u32 2147483647, %v1094
    %vm1105 = vcmp.eq.f32.partialorder %v1104, 8.507059e+37
    %v1106 = vand.u32 %v1094, 2147483648
    %v1107 = vor.u32 1.1754944e-38, %v1106
    %v1108 = vsel %vm1105, %v1107, %v1103
    %v1109 = vmul.f32 1.0, %v1108
    %v1110 = vtanh.pop %v1090
    %v1111 = vmul.f32 %v1010, %v1109
    %1113 = vrot.lane.b32.xlu0 %v1109, 64
    %v1114 = vpop.permute.xlu0 %1113
    %v1116 = vmul.f32 %v1110, %v1114
    %1118 = vrot.lane.b32.xlu0 %v1116, 32
    %v1119 = vpop.permute.xlu0 %1118
    %v1121 = vadd.f32 %v1111, %v1119
    %v1122 = vtanh.pop %v1121
    %1124 = vrot.lane.b32.xlu0 %v1122, 64
    %v1125 = vpop.permute.xlu0 %1124
    %v1127 = vmul.f32 %v1109, %v1125
    %vm1128 = vcmp.gt.f32.partialorder %v1061, 0.5
    %v1129 = vsub.f32 1.0, %v1064
    %v1130 = vsel %vm1128, %v1129, %v1064
    %v1131 = vsel %vm1128, 1, 0
    %1132 = vset.pattern.permute.xlu0 0
    %1133 = vperm.xlu0 %1132, %v1131
    %v1134 = vpop.permute.xlu0 %1133
    %vm1135 = vcmp.eq.s32.totalorder %v1134, 1
    %1137 = vrot.lane.b32.xlu0 %v1127, 64
    %v1138 = vpop.permute.xlu0 %1137
    %v1140 = vsel %vm1135, %v1008, %v1138
    %1142 = vset.pattern.permute.xlu0 0
    %1143 = vperm.xlu0 %1142, %v1130
    %v1144 = vpop.permute.xlu0 %1143
    %v1146 = vmul.f32 %v1140, %v1144
    %v1147 = vsel %vm1135, %v1010, %v1121
    %v1148 = vmul.f32 %v1147, %v1144
    %v1149 = vmul.f32 %v1148, %v179
    %v1150 = vsel %vm95, %v1149, 0.0
    %1151 = vadd.xlane.f32.xlu0 %v1150
    %v1152 = vpop.xlane.xlu0 %1151
    %v1153 = vadd.f32 %v1152, %v186
    %v1154 = vxor.u32 %v1153, 2147483648
    %v1155 = vmul.f32 %v1154, 1.442695
    %v1156 = vpow.pop %v1155
    %v1157 = vadd.f32 %v1156, 1.0
    %v1158 = vrcp.pop %v1157
    %v1159 = vmul.f32 %v1157, %v1158
    %v1160 = vsub.f32 1.0, %v1159
    %v1161 = vmul.f32 %v1158, %v1160
    %v1162 = vadd.f32 %v1158, %v1161
    %vm1163 = vweird.f32 %v1157
    %vm1164 = vweird.f32 %v1158
    %vm1165 = vmor %vm1163, %vm1164
    %v1166 = vsel %vm1165, %v1158, %v1162
    %v1167 = vand.u32 2147483647, %v1157
    %vm1168 = vcmp.eq.f32.partialorder %v1167, 8.507059e+37
    %v1169 = vand.u32 %v1157, 2147483648
    %v1170 = vor.u32 1.1754944e-38, %v1169
    %v1171 = vsel %vm1168, %v1170, %v1166
    %v1172 = vmul.f32 1.0, %v1171
    %v1173 = vsel %vm1128, %v1035, %v1172
    %v1174 = vadd.f32 %v1041, %v1035
    %v1175 = vmax.f32 %v1174, 0.0
    %v1176 = vmin.f32 %v1175, 1.0
    %v1177 = vmul.f32 %v1176, %v1129
    %v1178 = vmul.f32 %v1172, %v1064
    %v1179 = vsel %vm1128, %v1177, %v1178
    %v1180 = vrcp.pop %v1179
    %v1181 = vmul.f32 %v1179, %v1180
    %v1182 = vsub.f32 1.0, %v1181
    %v1183 = vmul.f32 %v1180, %v1182
    %v1184 = vadd.f32 %v1180, %v1183
    %vm1185 = vweird.f32 %v1179
    %vm1186 = vweird.f32 %v1180
    %vm1187 = vmor %vm1185, %vm1186
    %v1188 = vsel %vm1187, %v1180, %v1184
    %v1189 = vand.u32 2147483647, %v1179
    %vm1190 = vcmp.eq.f32.partialorder %v1189, 8.507059e+37
    %v1191 = vand.u32 %v1179, 2147483648
    %v1192 = vor.u32 1.1754944e-38, %v1191
    %v1193 = vsel %vm1190, %v1192, %v1188
    %v1194 = vmul.f32 0.5, %v1193
    %v1195 = vceil.f32 %v1194
    %v1196 = vsub.f32 %v1195, 1.0
    %vm1197 = vcmp.gt.f32.partialorder %v1196, 0.0
    %v1198 = vsel %vm1197, 1, 0
    %v1199 = vcvt.s32.f32 %v1198
    %s1200 = scalar_lea.vmem [#allocation13], 56
    %1201 = vst.msk [vmem:[%s1200] sm:$0xff] %vm95, %v1146
    %1202 = vst.msk [vmem:[#allocation2] sm:$0xff] %vm95, %v1146
    %1203 = vst.msk [vmem:[#allocation3] sm:$0xff] %vm95, %v1148
    %vm1204 = vcmask 7168
    %1205 = vst.msk [vmem:[#allocation4] sm:$0xff] %vm1204, %v1179
    %1206 = vst.msk [vmem:[#allocation5] sm:$0xff] %vm1204, %v1173
    %1207 = vst.msk [vmem:[#allocation6] sm:$0xff] %vm1204, %v1199
    // Predicated region
    $region46: #{tpu_custom_call.1} parent=1 // pred_check
      %p1208 = pneg %p67
    $region47: #{tpu_custom_call.1} parent=1 // pred_check_branch
      %1210 = sbr.rel (%p1208) target = $region49
    $region48: #{tpu_custom_call.1} parent=1 // pred_region
      %1211 = vst.msk [vmem:[%s9] sm:$0xff] %vm1204, %v1199
      %1212 = vst.msk [vmem:[%s10] sm:$0xff] %vm1204, %v1173
    $region49: #{tpu_custom_call.1} parent=1 // pred_fallthru
      _
    // Predicated region
    $region50: #{tpu_custom_call.1} parent=1 // pred_check
      _
    $region51: #{tpu_custom_call.1} parent=1 // pred_check_branch
      %1214 = sbr.rel (0) target = $region53
    $region52: #{tpu_custom_call.1} parent=1 // pred_region
      %1216 = vsyncadd [#allocation10], 0
      %s1217 = sshll.u32 [#allocation13], 4
      %s1218 = int_to_ptr.vmem [resolvable:$true] %s1217
      %s1219 = sshll.u32 %s8, 4
      %s1220 = int_to_ptr.hbm [resolvable:$true] %s1219
      %1225 = dma.vmem_to_hbm [thread:$0]  %s1218, 1024, %s1220, [#allocation10], 128, 128, 8
    $region53: #{tpu_custom_call.1} parent=1 // pred_fallthru
      _
    // Predicated region
    $region54: #{tpu_custom_call.1} parent=1 // pred_check
      _
    $region55: #{tpu_custom_call.1} parent=1 // pred_check_branch
      %1227 = sbr.rel (0) target = $region57
    $region56: #{tpu_custom_call.1} parent=1 // pred_region
      _
    $region57: #{tpu_custom_call.1} parent=1 // pred_fallthru
      _
    // Predicated region
    $region58: #{tpu_custom_call.1} parent=1 // pred_check
      _
    $region59: #{tpu_custom_call.1} parent=1 // pred_check_branch
      %1229 = sbr.rel (0) target = $region61
    $region60: #{tpu_custom_call.1} parent=1 // pred_region
      _
    $region61: #{tpu_custom_call.1} parent=1 // pred_fallthru
      _
    // Predicated region
    $region62: #{tpu_custom_call.1} parent=1 // pred_check
      _
    $region63: #{tpu_custom_call.1} parent=1 // pred_check_branch
      %1231 = sbr.rel (0) target = $region65
    $region64: #{tpu_custom_call.1} parent=1 // pred_region
      %1233 = dma.done [#allocation10], 1024
    $region65: #{tpu_custom_call.1} parent=1 // pred_fallthru
      _
    // Predicated region
    $region66: #{tpu_custom_call.1} parent=1 // pred_check
      _
    $region67: #{tpu_custom_call.1} parent=1 // pred_check_branch
      %1235 = sbr.rel (0) target = $region69
    $region68: #{tpu_custom_call.1} parent=1 // pred_region
      _
    $region69: #{tpu_custom_call.1} parent=1 // pred_fallthru
      _
    // Predicated region
    $region70: #{tpu_custom_call.1} parent=1 // pred_check
      _
    $region71: #{tpu_custom_call.1} parent=1 // pred_check_branch
      %1237 = sbr.rel (0) target = $region73
    $region72: #{tpu_custom_call.1} parent=1 // pred_region
      _
    $region73: #{tpu_custom_call.1} parent=1 // pred_fallthru
      _
    %1238 = vsyncpa [#allocation9], 1
    %1239 = vsyncpa [#allocation12], 1
    %1240 = vsyncpa [#allocation10], 1

</llo_original>
